<compile_context>
chip_gen: v7x
topology: tpu7x:2x2x1
jax: 0.10.0
libtpu: 0.0.40
codegen_flags: <defaults>
</compile_context>

<pallas_src>
import jax
import jax.numpy as jnp
from jax import lax
from jax.experimental import pallas as pl
from jax.experimental.pallas import tpu as pltpu

SIGMA = 0.5
EPS = 1e-7


def _default_block(n: int) -> int:
    """Block size that divides n, respects (8, 128) tiling and keeps the
    (blk, blk, n) compare/select temporaries well inside v7x's 64 MiB VMEM."""
    if n % 128 == 0:
        blk = 128
        # ~4 live f32 copies of the (blk, blk, n) temporary; keep them under ~24 MiB.
        while blk > 8 and 16 * blk * blk * n > 24 * 1024 * 1024:
            blk //= 2
        return blk
    if n % 8 == 0:
        return 8
    return n  # tiny / odd batch: a single block whose shape equals the full dims


def _make_rd_kernel(n, rb, mb, sigma):
    """Kernel over grid (n//rb row blocks, n//mb column chunks)."""

    def kernel(fi_ref, li_ref, fa_ref, la_ref, fm_ref, lm_ref,
               out_ref, r_ref, em_ref, z_ref, fmax_ref):
        i = pl.program_id(0)          # row block   ("parallel")
        m = pl.program_id(1)          # column chunk ("arbitrary", innermost)
        i0 = i * rb
        m0 = m * mb

        feat_i = fi_ref[...].astype(jnp.float32)                       # (rb, d)
        lab_i = li_ref[...].astype(jnp.float32)                        # (rb, L)
        sq_i = jnp.sum(feat_i * feat_i, axis=-1, keepdims=True)        # (rb, 1)

        # ---- once per row block: full-row R, un-normalized softmax, Z, row max ----
        @pl.when(m == 0)
        def _init_row_block():
            feat_all = fa_ref[...].astype(jnp.float32)                 # (n, d)
            lab_all = la_ref[...].astype(jnp.float32)                  # (n, L)

            # F[i, :] = -||f_i - f_j||_2 * sigma  via the Gram matrix (MXU).
            sq_all = jnp.sum(feat_all * feat_all, axis=-1)[None, :]    # (1, n)
            gram = lax.dot_general(feat_i, feat_all, (((1,), (1,)), ((), ())),
                                   preferred_element_type=jnp.float32)  # (rb, n)
            d2 = sq_i + sq_all - 2.0 * gram
            rows = i0 + lax.broadcasted_iota(jnp.int32, (rb, n), 0)
            cols = lax.broadcasted_iota(jnp.int32, (rb, n), 1)
            offd = rows != cols
            d2 = jnp.where(offd, jnp.maximum(d2, 0.0), 0.0)            # clamp + exact 0 diag
            F = -jnp.sqrt(d2) * sigma                                  # (rb, n)

            # R[i, :] = sum_l |label_i - label_j|  (L1 label distances).
            R = jnp.sum(jnp.abs(lab_i[:, None, :] - lab_all[None, :, :]), axis=-1)

            # Row softmax kept UN-normalized; the 1/Z is folded into the log later.
            fmax = jnp.max(F, axis=1, keepdims=True)                   # (rb, 1)
            e = jnp.exp(F - fmax)                                      # (rb, n)
            z = jnp.sum(e, axis=1, keepdims=True)                      # (rb, 1)

            r_ref[...] = R
            em_ref[...] = jnp.where(offd, e, 0.0)                      # drop k == i weights
            z_ref[...] = z
            fmax_ref[...] = fmax
            out_ref[...] = jnp.zeros_like(out_ref)                     # zero the accumulator

        # ---- this m-chunk of "positive" columns ----
        feat_m = fm_ref[...].astype(jnp.float32)                       # (mb, d)
        lab_m = lm_ref[...].astype(jnp.float32)                        # (mb, L)
        sq_m = jnp.sum(feat_m * feat_m, axis=-1)[None, :]              # (1, mb)
        gram_m = lax.dot_general(feat_i, feat_m, (((1,), (1,)), ((), ())),
                                 preferred_element_type=jnp.float32)   # (rb, mb)
        d2_m = sq_i + sq_m - 2.0 * gram_m
        rows = i0 + lax.broadcasted_iota(jnp.int32, (rb, mb), 0)
        cols = m0 + lax.broadcasted_iota(jnp.int32, (rb, mb), 1)
        offd_m = rows != cols
        d2_m = jnp.where(offd_m, jnp.maximum(d2_m, 0.0), 0.0)
        F_m = -jnp.sqrt(d2_m) * sigma - fmax_ref[...]                  # shifted F, (rb, mb)
        R_m = jnp.sum(jnp.abs(lab_i[:, None, :] - lab_m[None, :, :]), axis=-1)  # (rb, mb)

        # S_u[i, m] = sum_{k != i} [R[i,k] >= R[i,m]] * e[i,k]
        # Fused select (single vsel), no (n, n, n) tensor, no cast+multiply.
        R_full = r_ref[...]                                            # (rb, n)
        em = em_ref[...]                                               # (rb, n)
        comp = R_full[:, None, :] >= R_m[:, :, None]                   # (rb, mb, n) bool
        S_u = jnp.sum(jnp.where(comp, em[:, None, :], 0.0), axis=-1)   # (rb, mb)

        # terms = F_shift - log(S/Z + eps) = F_shift - log(S_u + eps*Z) + log(Z)
        z = z_ref[...]                                                 # (rb, 1)
        terms = F_m - jnp.log(S_u + EPS * z) + jnp.log(z)
        terms = jnp.where(offd_m, terms, 0.0)
        out_ref[...] += jnp.sum(terms)                                 # lane-padded accumulator

    return kernel


def rd_loss(feature, label, *, sigma=SIGMA, row_block=None, col_block=None):
    n, d = feature.shape
    n2, L = label.shape
    assert n == n2 and n >= 2
    rb = row_block if row_block is not None else _default_block(n)
    mb = col_block if col_block is not None else _default_block(n)
    assert n % rb == 0 and n % mb == 0, "block sizes must divide the batch size"
    ni, nm = n // rb, n // mb

    # Explicit VMEM budget (sized for the blocks, capped for v7x's 64 MiB VMEM).
    est_bytes = 4 * (
        2 * (rb + mb + n) * (d + L)      # double-buffered input blocks
        + (2 * n + 2) * rb               # VMEM scratches (R, e_masked, Z, fmax)
        + rb * (n + mb) * L              # L1 broadcast temporaries
        + 4 * rb * mb * n                # compare / select / reduce temporaries
        + 8 * rb * n                     # misc (rb, n) temporaries
    )
    vmem_limit = int(min(max(2 * est_bytes, 8 * 1024 * 1024), 48 * 1024 * 1024))

    kernel = _make_rd_kernel(n=n, rb=rb, mb=mb, sigma=sigma)

    grid_spec = pltpu.PrefetchScalarGridSpec(
        num_scalar_prefetch=0,
        grid=(ni, nm),
        in_specs=[
            pl.BlockSpec((rb, d), lambda i, m: (i, 0)),   # feature rows of this i-block
            pl.BlockSpec((rb, L), lambda i, m: (i, 0)),   # label   rows of this i-block
            pl.BlockSpec((n, d), lambda i, m: (0, 0)),    # all features (full rows)
            pl.BlockSpec((n, L), lambda i, m: (0, 0)),    # all labels   (full rows)
            pl.BlockSpec((mb, d), lambda i, m: (m, 0)),   # feature rows of this m-chunk
            pl.BlockSpec((mb, L), lambda i, m: (m, 0)),   # label   rows of this m-chunk
        ],
        out_specs=pl.BlockSpec((1, 1, 128), lambda i, m: (i, 0, 0)),
        scratch_shapes=[
            pltpu.VMEM((rb, n), jnp.float32),   # full-row R
            pltpu.VMEM((rb, n), jnp.float32),   # masked un-normalized softmax numerators
            pltpu.VMEM((rb, 1), jnp.float32),   # row partition function Z
            pltpu.VMEM((rb, 1), jnp.float32),   # row max of F
        ],
    )

    partials = pl.pallas_call(
        kernel,
        out_shape=jax.ShapeDtypeStruct((ni, 1, 128), jnp.float32),
        grid_spec=grid_spec,
        compiler_params=pltpu.CompilerParams(
            dimension_semantics=("parallel", "arbitrary"),
            vmem_limit_bytes=vmem_limit,
        ),
    )(feature, label, feature, label, feature, label)

    return -jnp.sum(partials[:, 0, 0]) / (n * (n - 1))


def rd_loss_ref(feature, label, sigma=SIGMA):
    # Pure-JAX reference mirroring the PyTorch module semantics.
    feature = feature.astype(jnp.float32)
    label = label.astype(jnp.float32)
    n = feature.shape[0]
    F = -jnp.linalg.norm(feature[:, None, :] - feature[None, :, :], axis=-1) * sigma
    R = jnp.sum(jnp.abs(label[:, None, :] - label[None, :, :]), axis=-1)
    F = F - jnp.max(F, axis=1, keepdims=True)
    scaled = jax.nn.softmax(F, axis=1)
    offdiag = ~jnp.eye(n, dtype=bool)
    w = jnp.where(offdiag, scaled, 0.0)
    comp = (R[:, None, :] >= R[:, :, None]).astype(jnp.float32)
    S = jnp.sum(comp * w[:, None, :], axis=-1)
    terms = jnp.where(offdiag, F - jnp.log(S + EPS), 0.0)
    return -jnp.sum(terms) / (n * (n - 1))


if __name__ == "__main__":
    key = jax.random.PRNGKey(0)
    k1, k2 = jax.random.split(key)
    n, d, L = 16, 32, 4                     # batch=16 samples, 32-d features, 4-d labels
    feature = jax.random.normal(k1, (n, d), dtype=jnp.float32)
    label = jax.random.uniform(k2, (n, L), dtype=jnp.float32)

    loss = rd_loss(feature, label)          # grid (2, 2): 2 row blocks x 2 column chunks
    jax.block_until_ready(loss)

    ref = rd_loss_ref(feature, label)
    assert jnp.allclose(loss, ref, atol=1e-4, rtol=1e-4), (loss, ref)

    print("KERNEL_OK")
</pallas_src>

<mosaic_0001>
module attributes {stable_mosaic.version = 11 : i64} {
  func.func @kernel(%arg0: i32, %arg1: i32, %arg2: memref<8x32xf32, #tpu.memory_space<vmem>>, %arg3: memref<8x4xf32, #tpu.memory_space<vmem>>, %arg4: memref<16x32xf32, #tpu.memory_space<vmem>>, %arg5: memref<16x4xf32, #tpu.memory_space<vmem>>, %arg6: memref<8x32xf32, #tpu.memory_space<vmem>>, %arg7: memref<8x4xf32, #tpu.memory_space<vmem>>, %arg8: memref<1x1x128xf32, #tpu.memory_space<vmem>>, %arg9: memref<8x16xf32, #tpu.memory_space<vmem>>, %arg10: memref<8x16xf32, #tpu.memory_space<vmem>>, %arg11: memref<8x1xf32, #tpu.memory_space<vmem>>, %arg12: memref<8x1xf32, #tpu.memory_space<vmem>>) attributes {dimension_semantics = [#tpu.dimension_semantics<parallel>, #tpu.dimension_semantics<arbitrary>], iteration_bounds = array<i64: 2, 2>, scalar_prefetch = 0 : i64, scratch_operands = 4 : i64, tpu.core_type = #tpu.core_type<tc>, window_params = [{transform_indices = @transform_0, window_bounds = array<i64: 8, 32>}, {transform_indices = @transform_1, window_bounds = array<i64: 8, 4>}, {pipeline_mode = #tpu.pipeline_mode<synchronous>, transform_indices = @transform_2, window_bounds = array<i64: 16, 32>}, {pipeline_mode = #tpu.pipeline_mode<synchronous>, transform_indices = @transform_3, window_bounds = array<i64: 16, 4>}, {transform_indices = @transform_4, window_bounds = array<i64: 8, 32>}, {transform_indices = @transform_5, window_bounds = array<i64: 8, 4>}, {transform_indices = @transform_6, window_bounds = array<i64: 1, 1, 128>}]} {
    %c8_i32 = arith.constant 8 : i32
    %0 = arith.muli %arg0, %c8_i32 : i32
    %c8_i32_0 = arith.constant 8 : i32
    %1 = arith.muli %arg1, %c8_i32_0 : i32
    %c0 = arith.constant 0 : index
    %c0_1 = arith.constant 0 : index
    %2 = vector.load %arg2[%c0, %c0_1] : memref<8x32xf32, #tpu.memory_space<vmem>>, vector<8x32xf32>
    %c0_2 = arith.constant 0 : index
    %c0_3 = arith.constant 0 : index
    %3 = vector.load %arg3[%c0_2, %c0_3] : memref<8x4xf32, #tpu.memory_space<vmem>>, vector<8x4xf32>
    %4 = arith.mulf %2, %2 : vector<8x32xf32>
    %cst = arith.constant dense<0.000000e+00> : vector<8xf32>
    %5 = vector.multi_reduction <add>, %4, %cst [1] : vector<8x32xf32> to vector<8xf32>
    %6 = vector.shape_cast %5 : vector<8xf32> to vector<8x1xf32>
    %c0_i32 = arith.constant 0 : i32
    %7 = arith.cmpi eq, %arg1, %c0_i32 : i32
    %8 = arith.extui %7 : i1 to i32
    %c0_i32_4 = arith.constant 0 : i32
    %9 = arith.cmpi ne, %8, %c0_i32_4 : i32
    scf.if %9 {
      %c0_36 = arith.constant 0 : index
      %c0_37 = arith.constant 0 : index
      %81 = vector.load %arg4[%c0_36, %c0_37] : memref<16x32xf32, #tpu.memory_space<vmem>>, vector<16x32xf32>
      %c0_38 = arith.constant 0 : index
      %c0_39 = arith.constant 0 : index
      %82 = vector.load %arg5[%c0_38, %c0_39] : memref<16x4xf32, #tpu.memory_space<vmem>>, vector<16x4xf32>
      %83 = arith.mulf %81, %81 : vector<16x32xf32>
      %cst_40 = arith.constant dense<0.000000e+00> : vector<16xf32>
      %84 = vector.multi_reduction <add>, %83, %cst_40 [1] : vector<16x32xf32> to vector<16xf32>
      %85 = vector.shape_cast %84 : vector<16xf32> to vector<1x16xf32>
      %cst_41 = arith.constant dense<0.000000e+00> : vector<8x16xf32>
      %86 = tpu.matmul %2, %81, %cst_41 {dimension_numbers = #tpu.dot_dimension_numbers<[1], [1], [0], [0], [0, 0, 1, 0], [], []>} : vector<8x32xf32>, vector<16x32xf32>, vector<8x16xf32> -> vector<8x16xf32>
      %87 = vector.broadcast %6 : vector<8x1xf32> to vector<8x16xf32>
      %88 = vector.broadcast %85 : vector<1x16xf32> to vector<8x16xf32>
      %89 = arith.addf %87, %88 : vector<8x16xf32>
      %cst_42 = arith.constant 2.000000e+00 : f32
      %90 = vector.broadcast %cst_42 : f32 to vector<8x16xf32>
      %91 = arith.mulf %90, %86 : vector<8x16xf32>
      %92 = arith.subf %89, %91 : vector<8x16xf32>
      %93 = tpu.iota {dimensions = array<i32: 0>} : vector<8x16xi32>
      %94 = vector.broadcast %0 : i32 to vector<8x16xi32>
      %95 = arith.addi %94, %93 : vector<8x16xi32>
      %96 = tpu.iota {dimensions = array<i32: 1>} : vector<8x16xi32>
      %97 = arith.cmpi ne, %95, %96 : vector<8x16xi32>
      %cst_43 = arith.constant 0.000000e+00 : f32
      %98 = vector.broadcast %cst_43 : f32 to vector<8x16xf32>
      %99 = arith.maximumf %92, %98 : vector<8x16xf32>
      %cst_44 = arith.constant 0.000000e+00 : f32
      %100 = vector.broadcast %cst_44 : f32 to vector<8x16xf32>
      %101 = arith.select %97, %99, %100 : vector<8x16xi1>, vector<8x16xf32>
      %102 = math.sqrt %101 : vector<8x16xf32>
      %cst_45 = arith.constant 0.000000e+00 : f32
      %103 = vector.broadcast %cst_45 : f32 to vector<8x16xf32>
      %104 = arith.subf %103, %102 : vector<8x16xf32>
      %cst_46 = arith.constant 5.000000e-01 : f32
      %105 = vector.broadcast %cst_46 : f32 to vector<8x16xf32>
      %106 = arith.mulf %104, %105 : vector<8x16xf32>
      %107 = vector.shape_cast %3 : vector<8x4xf32> to vector<8x1x4xf32>
      %108 = vector.shape_cast %82 : vector<16x4xf32> to vector<1x16x4xf32>
      %109 = vector.broadcast %107 : vector<8x1x4xf32> to vector<8x16x4xf32>
      %110 = vector.broadcast %108 : vector<1x16x4xf32> to vector<8x16x4xf32>
      %111 = arith.subf %109, %110 : vector<8x16x4xf32>
      %112 = math.absf %111 : vector<8x16x4xf32>
      %cst_47 = arith.constant dense<0.000000e+00> : vector<8x16xf32>
      %113 = vector.multi_reduction <add>, %112, %cst_47 [2] : vector<8x16x4xf32> to vector<8x16xf32>
      %cst_48 = arith.constant dense<0xFF800000> : vector<8xf32>
      %114 = vector.multi_reduction <maximumf>, %106, %cst_48 [1] : vector<8x16xf32> to vector<8xf32>
      %115 = vector.shape_cast %114 : vector<8xf32> to vector<8x1xf32>
      %116 = vector.broadcast %115 : vector<8x1xf32> to vector<8x16xf32>
      %117 = arith.subf %106, %116 : vector<8x16xf32>
      %118 = math.exp %117 : vector<8x16xf32>
      %cst_49 = arith.constant dense<0.000000e+00> : vector<8xf32>
      %119 = vector.multi_reduction <add>, %118, %cst_49 [1] : vector<8x16xf32> to vector<8xf32>
      %120 = vector.shape_cast %119 : vector<8xf32> to vector<8x1xf32>
      %c0_50 = arith.constant 0 : index
      %c0_51 = arith.constant 0 : index
      %121 = vector.load %arg9[%c0_50, %c0_51] : memref<8x16xf32, #tpu.memory_space<vmem>>, vector<8x16xf32>
      tpu.vector_store %arg9[%c0_50, %c0_51], %113 {strides = array<i32>} : memref<8x16xf32, #tpu.memory_space<vmem>>, vector<8x16xf32>,
      %cst_52 = arith.constant 0.000000e+00 : f32
      %122 = vector.broadcast %cst_52 : f32 to vector<8x16xf32>
      %123 = arith.select %97, %118, %122 : vector<8x16xi1>, vector<8x16xf32>
      %c0_53 = arith.constant 0 : index
      %c0_54 = arith.constant 0 : index
      %124 = vector.load %arg10[%c0_53, %c0_54] : memref<8x16xf32, #tpu.memory_space<vmem>>, vector<8x16xf32>
      tpu.vector_store %arg10[%c0_53, %c0_54], %123 {strides = array<i32>} : memref<8x16xf32, #tpu.memory_space<vmem>>, vector<8x16xf32>,
      %c0_55 = arith.constant 0 : index
      %c0_56 = arith.constant 0 : index
      %125 = vector.load %arg11[%c0_55, %c0_56] : memref<8x1xf32, #tpu.memory_space<vmem>>, vector<8x1xf32>
      tpu.vector_store %arg11[%c0_55, %c0_56], %120 {strides = array<i32>} : memref<8x1xf32, #tpu.memory_space<vmem>>, vector<8x1xf32>,
      %c0_57 = arith.constant 0 : index
      %c0_58 = arith.constant 0 : index
      %126 = vector.load %arg12[%c0_57, %c0_58] : memref<8x1xf32, #tpu.memory_space<vmem>>, vector<8x1xf32>
      tpu.vector_store %arg12[%c0_57, %c0_58], %115 {strides = array<i32>} : memref<8x1xf32, #tpu.memory_space<vmem>>, vector<8x1xf32>,
      %cst_59 = arith.constant 0.000000e+00 : f32
      %127 = vector.broadcast %cst_59 : f32 to vector<1x1x128xf32>
      %c0_60 = arith.constant 0 : index
      %c0_61 = arith.constant 0 : index
      %c0_62 = arith.constant 0 : index
      %128 = vector.load %arg8[%c0_60, %c0_61, %c0_62] : memref<1x1x128xf32, #tpu.memory_space<vmem>>, vector<1x1x128xf32>
      tpu.vector_store %arg8[%c0_60, %c0_61, %c0_62], %127 {strides = array<i32>} : memref<1x1x128xf32, #tpu.memory_space<vmem>>, vector<1x1x128xf32>,
    } else {
    }
    %c0_5 = arith.constant 0 : index
    %c0_6 = arith.constant 0 : index
    %10 = vector.load %arg6[%c0_5, %c0_6] : memref<8x32xf32, #tpu.memory_space<vmem>>, vector<8x32xf32>
    %c0_7 = arith.constant 0 : index
    %c0_8 = arith.constant 0 : index
    %11 = vector.load %arg7[%c0_7, %c0_8] : memref<8x4xf32, #tpu.memory_space<vmem>>, vector<8x4xf32>
    %12 = arith.mulf %10, %10 : vector<8x32xf32>
    %cst_9 = arith.constant dense<0.000000e+00> : vector<8xf32>
    %13 = vector.multi_reduction <add>, %12, %cst_9 [1] : vector<8x32xf32> to vector<8xf32>
    %14 = vector.shape_cast %13 : vector<8xf32> to vector<1x8xf32>
    %cst_10 = arith.constant dense<0.000000e+00> : vector<8x8xf32>
    %15 = tpu.matmul %2, %10, %cst_10 {dimension_numbers = #tpu.dot_dimension_numbers<[1], [1], [0], [0], [0, 0, 1, 0], [], []>} : vector<8x32xf32>, vector<8x32xf32>, vector<8x8xf32> -> vector<8x8xf32>
    %16 = vector.broadcast %6 : vector<8x1xf32> to vector<8x8xf32>
    %17 = vector.broadcast %14 : vector<1x8xf32> to vector<8x8xf32>
    %18 = arith.addf %16, %17 : vector<8x8xf32>
    %cst_11 = arith.constant 2.000000e+00 : f32
    %19 = vector.broadcast %cst_11 : f32 to vector<8x8xf32>
    %20 = arith.mulf %19, %15 : vector<8x8xf32>
    %21 = arith.subf %18, %20 : vector<8x8xf32>
    %22 = tpu.iota {dimensions = array<i32: 0>} : vector<8x8xi32>
    %23 = vector.broadcast %0 : i32 to vector<8x8xi32>
    %24 = arith.addi %23, %22 : vector<8x8xi32>
    %25 = tpu.iota {dimensions = array<i32: 1>} : vector<8x8xi32>
    %26 = vector.broadcast %1 : i32 to vector<8x8xi32>
    %27 = arith.addi %26, %25 : vector<8x8xi32>
    %28 = arith.cmpi ne, %24, %27 : vector<8x8xi32>
    %cst_12 = arith.constant 0.000000e+00 : f32
    %29 = vector.broadcast %cst_12 : f32 to vector<8x8xf32>
    %30 = arith.maximumf %21, %29 : vector<8x8xf32>
    %cst_13 = arith.constant 0.000000e+00 : f32
    %31 = vector.broadcast %cst_13 : f32 to vector<8x8xf32>
    %32 = arith.select %28, %30, %31 : vector<8x8xi1>, vector<8x8xf32>
    %33 = math.sqrt %32 : vector<8x8xf32>
    %cst_14 = arith.constant 0.000000e+00 : f32
    %34 = vector.broadcast %cst_14 : f32 to vector<8x8xf32>
    %35 = arith.subf %34, %33 : vector<8x8xf32>
    %cst_15 = arith.constant 5.000000e-01 : f32
    %36 = vector.broadcast %cst_15 : f32 to vector<8x8xf32>
    %37 = arith.mulf %35, %36 : vector<8x8xf32>
    %c0_16 = arith.constant 0 : index
    %c0_17 = arith.constant 0 : index
    %38 = vector.load %arg12[%c0_16, %c0_17] : memref<8x1xf32, #tpu.memory_space<vmem>>, vector<8x1xf32>
    %39 = vector.broadcast %38 : vector<8x1xf32> to vector<8x8xf32>
    %40 = arith.subf %37, %39 : vector<8x8xf32>
    %41 = vector.shape_cast %3 : vector<8x4xf32> to vector<8x1x4xf32>
    %42 = vector.shape_cast %11 : vector<8x4xf32> to vector<1x8x4xf32>
    %43 = vector.broadcast %41 : vector<8x1x4xf32> to vector<8x8x4xf32>
    %44 = vector.broadcast %42 : vector<1x8x4xf32> to vector<8x8x4xf32>
    %45 = arith.subf %43, %44 : vector<8x8x4xf32>
    %46 = math.absf %45 : vector<8x8x4xf32>
    %cst_18 = arith.constant dense<0.000000e+00> : vector<8x8xf32>
    %47 = vector.multi_reduction <add>, %46, %cst_18 [2] : vector<8x8x4xf32> to vector<8x8xf32>
    %c0_19 = arith.constant 0 : index
    %c0_20 = arith.constant 0 : index
    %48 = vector.load %arg9[%c0_19, %c0_20] : memref<8x16xf32, #tpu.memory_space<vmem>>, vector<8x16xf32>
    %c0_21 = arith.constant 0 : index
    %c0_22 = arith.constant 0 : index
    %49 = vector.load %arg10[%c0_21, %c0_22] : memref<8x16xf32, #tpu.memory_space<vmem>>, vector<8x16xf32>
    %50 = vector.shape_cast %48 : vector<8x16xf32> to vector<8x1x16xf32>
    %51 = vector.shape_cast %47 : vector<8x8xf32> to vector<8x8x1xf32>
    %52 = vector.broadcast %50 : vector<8x1x16xf32> to vector<8x8x16xf32>
    %53 = vector.broadcast %51 : vector<8x8x1xf32> to vector<8x8x16xf32>
    %54 = arith.cmpf oge, %52, %53 : vector<8x8x16xf32>
    %55 = vector.shape_cast %49 : vector<8x16xf32> to vector<8x1x16xf32>
    %cst_23 = arith.constant 0.000000e+00 : f32
    %56 = vector.shape_cast %55 : vector<8x1x16xf32> to vector<8x1x16xf32>
    %57 = vector.broadcast %56 : vector<8x1x16xf32> to vector<8x8x16xf32>
    %58 = vector.broadcast %cst_23 : f32 to vector<8x8x16xf32>
    %59 = arith.select %54, %57, %58 : vector<8x8x16xi1>, vector<8x8x16xf32>
    %cst_24 = arith.constant dense<0.000000e+00> : vector<8x8xf32>
    %60 = vector.multi_reduction <add>, %59, %cst_24 [2] : vector<8x8x16xf32> to vector<8x8xf32>
    %c0_25 = arith.constant 0 : index
    %c0_26 = arith.constant 0 : index
    %61 = vector.load %arg11[%c0_25, %c0_26] : memref<8x1xf32, #tpu.memory_space<vmem>>, vector<8x1xf32>
    %cst_27 = arith.constant 1.000000e-07 : f32
    %62 = vector.broadcast %cst_27 : f32 to vector<8x1xf32>
    %63 = arith.mulf %62, %61 : vector<8x1xf32>
    %64 = vector.broadcast %63 : vector<8x1xf32> to vector<8x8xf32>
    %65 = arith.addf %60, %64 : vector<8x8xf32>
    %66 = math.log %65 : vector<8x8xf32>
    %67 = arith.subf %40, %66 : vector<8x8xf32>
    %68 = math.log %61 : vector<8x1xf32>
    %69 = vector.broadcast %68 : vector<8x1xf32> to vector<8x8xf32>
    %70 = arith.addf %67, %69 : vector<8x8xf32>
    %cst_28 = arith.constant 0.000000e+00 : f32
    %71 = vector.broadcast %cst_28 : f32 to vector<8x8xf32>
    %72 = arith.select %28, %70, %71 : vector<8x8xi1>, vector<8x8xf32>
    %c0_29 = arith.constant 0 : index
    %c0_30 = arith.constant 0 : index
    %c0_31 = arith.constant 0 : index
    %73 = vector.load %arg8[%c0_29, %c0_30, %c0_31] : memref<1x1x128xf32, #tpu.memory_space<vmem>>, vector<1x1x128xf32>
    %74 = vector.shape_cast %72 : vector<8x8xf32> to vector<1x8x8xf32>
    %cst_32 = arith.constant dense<0.000000e+00> : vector<1xf32>
    %75 = vector.multi_reduction <add>, %74, %cst_32 [1, 2] : vector<1x8x8xf32> to vector<1xf32>
    %76 = vector.shape_cast %75 : vector<1xf32> to vector<1x1x1xf32>
    %77 = vector.extract %76[0, 0, 0] : f32 from vector<1x1x1xf32>
    %78 = vector.broadcast %77 : f32 to vector<1x1x128xf32>
    %79 = arith.addf %73, %78 : vector<1x1x128xf32>
    %c0_33 = arith.constant 0 : index
    %c0_34 = arith.constant 0 : index
    %c0_35 = arith.constant 0 : index
    %80 = vector.load %arg8[%c0_33, %c0_34, %c0_35] : memref<1x1x128xf32, #tpu.memory_space<vmem>>, vector<1x1x128xf32>
    tpu.vector_store %arg8[%c0_33, %c0_34, %c0_35], %79 {strides = array<i32>} : memref<1x1x128xf32, #tpu.memory_space<vmem>>, vector<1x1x128xf32>,
    return
  }
  func.func @transform_0(%arg0: i32, %arg1: i32) -> (i32, i32) {
    %c0_i32 = arith.constant 0 : i32
    %c0_i32_0 = arith.constant 0 : i32
    return %arg0, %c0_i32 : i32, i32
  }
  func.func @transform_1(%arg0: i32, %arg1: i32) -> (i32, i32) {
    %c0_i32 = arith.constant 0 : i32
    %c0_i32_0 = arith.constant 0 : i32
    return %arg0, %c0_i32 : i32, i32
  }
  func.func @transform_2(%arg0: i32, %arg1: i32) -> (i32, i32) {
    %c0_i32 = arith.constant 0 : i32
    %c0_i32_0 = arith.constant 0 : i32
    %c0_i32_1 = arith.constant 0 : i32
    return %c0_i32, %c0_i32_0 : i32, i32
  }
  func.func @transform_3(%arg0: i32, %arg1: i32) -> (i32, i32) {
    %c0_i32 = arith.constant 0 : i32
    %c0_i32_0 = arith.constant 0 : i32
    %c0_i32_1 = arith.constant 0 : i32
    return %c0_i32, %c0_i32_0 : i32, i32
  }
  func.func @transform_4(%arg0: i32, %arg1: i32) -> (i32, i32) {
    %c0_i32 = arith.constant 0 : i32
    %c0_i32_0 = arith.constant 0 : i32
    return %arg1, %c0_i32 : i32, i32
  }
  func.func @transform_5(%arg0: i32, %arg1: i32) -> (i32, i32) {
    %c0_i32 = arith.constant 0 : i32
    %c0_i32_0 = arith.constant 0 : i32
    return %arg1, %c0_i32 : i32, i32
  }
  func.func @transform_6(%arg0: i32, %arg1: i32) -> (i32, i32, i32) {
    %c0_i32 = arith.constant 0 : i32
    %c0_i32_0 = arith.constant 0 : i32
    %c0_i32_1 = arith.constant 0 : i32
    return %arg0, %c0_i32, %c0_i32_0 : i32, i32, i32
  }
}

</mosaic_0001>

<llo_original>
// kernel: tpu_custom_call.1
$region0: #{tpu_custom_call.1}
  #allocation0 [shape = 'u32[]', space=smem, size = 0x4, offset = 0x4, fixed_abs, tag = 'smem constant byte address 0x4 - core index']
  #allocation1 [shape = 'u32[144,128]{1,0:T(1,128)}', space=vmem, size = 0x12000, scoped, tag = 'internal scratch']
  #allocation2 [shape = 'f32[8,16]{1,0:T(8,128)}', space=vmem, size = 0x1000, scoped, tag = 'scratch operand']
  #allocation3 [shape = 'f32[8,16]{1,0:T(8,128)}', space=vmem, size = 0x1000, scoped, tag = 'scratch operand']
  #allocation4 [shape = 'f32[8,1]{1,0:T(8,128)}', space=vmem, size = 0x1000, scoped, tag = 'scratch operand']
  #allocation5 [shape = 'f32[8,1]{1,0:T(8,128)}', space=vmem, size = 0x1000, scoped, tag = 'scratch operand']
  %s0 = inlined_call_operand.vmem [shape: f32[16,32], index: 0, kind: input, shape index: {}]
  %s1 = inlined_call_operand.vmem [shape: f32[16,4], index: 1, kind: input, shape index: {}]
  %s2 = inlined_call_operand.vmem [shape: f32[16,32], index: 2, kind: input, shape index: {}]
  %s3 = inlined_call_operand.vmem [shape: f32[16,4], index: 3, kind: input, shape index: {}]
  %s4 = inlined_call_operand.vmem [shape: f32[16,32], index: 4, kind: input, shape index: {}]
  %s5 = inlined_call_operand.vmem [shape: f32[16,4], index: 5, kind: input, shape index: {}]
  %s6 = inlined_call_operand.hbm [shape: f32[2,1,128], index: 6, kind: output, shape index: {}]
  %s7 = sld [smem:[#allocation0]]
  $region61: #{tpu_custom_call.1} parent=0
    _
  %s9 = ssub.s32 1, %s7
  %s10 = scalar_select 0, %s9, %s7
  $region1: #{tpu_custom_call.1} parent=0
    #allocation6 [shape = 'u8[1024]{0}', space=vmem, size = 0x400, scoped, tag = 'output window, operand 0']
    #allocation7 [shape = 's32[2]{0}', space=sflag, size = 0x8, scoped, tag = 'scoped memory for tpu_custom_call.1']
    %11 = vsyncpa [#allocation7], 0
    %s12 = scalar_lea.sflag [#allocation7], 1
    %13 = vsyncpa %s12, 0
    loop: start=0, step=1, limit=6
    $region2: #{tpu_custom_call.1} parent=1 // loop_pre_header
      _
    $region3: #{tpu_custom_call.1} parent=1 // loop_header
      %s15 = sphi 0, %s19
      %p16 = scmp.ge.s32.totalorder %s15, 6
      %s22 = sphi 0, %s34
      %s23 = sphi 0, %s30
      %s24 = sphi 0, %s22
      %s25 = sphi 0, %s23
      %s26 = sphi 0, %s24
      %s27 = sphi 0, %s25
      %s37 = sphi 0, %s39
      %s40 = sphi 0, %s37
      %s41 = sphi 0, %s40
      %s57 = sphi 0, %s41
      %s63 = sphi 0, %s65
      %s66 = sphi 0, %s63
      %s67 = sphi 0, %s66
      %s83 = sphi 0, %s67
      %s87 = sphi 0, %s87
      %s89 = sphi 0, %s87
      %s90 = sphi 0, %s89
      %s104 = sphi 0, %s90
      %s108 = sphi 0, %s108
      %s110 = sphi 0, %s108
      %s111 = sphi 0, %s110
      %s125 = sphi 0, %s111
      %s131 = sphi 0, %s133
      %s134 = sphi 0, %s131
      %s135 = sphi 0, %s134
      %s151 = sphi 0, %s135
      %s157 = sphi 0, %s159
      %s160 = sphi 0, %s157
      %s161 = sphi 0, %s160
      %s177 = sphi 0, %s161
      %s183 = sphi 0, %s185
      %s186 = sphi 0, %s183
      %s187 = sphi 0, %s186
      %s203 = sphi 0, %s187
    $region4: #{tpu_custom_call.1} parent=1 // loop_header_branch
      %18 = sbr.rel (%p16) target = $region8
    $region5: #{tpu_custom_call.1} parent=1 // loop_body
      %s20 = ssub.s32 %s15, 1
      %s21 = ssub.s32 %s15, 2
      %s28 = sadd.s32 1, %s23
      %p29 = scmp.ge.s32.totalorder %s28, 2
      %s30 = scalar_select %p29, 0, %s28
      %s31 = sadd.s32 1, %s22
      %s32 = scalar_select %p29, %s31, %s22
      %p33 = scmp.ge.s32.totalorder %s32, 2
      %s34 = scalar_select %p33, 0, %s32
      %s35 = ssub.s32 %s22, %s34
      %p36 = scmp.eq.s32.totalorder %s35, 0
      %s38 = sadd.s32 %s37, 1
      %s39 = scalar_select %p36, %s37, %s38
      %p42 = pneg %p36
      %p43 = scmp.eq.s32.totalorder %s15, 3
      %p44 = por %p42, %p43
      %p45 = scmp.ne.s32.totalorder %s37, %s40
      %p46 = scmp.eq.s32.totalorder %s15, 0
      %p47 = por %p45, %p46
      %p48 = scmp.ne.s32.totalorder %s37, %s40
      %p49 = scmp.eq.s32.totalorder %s20, 3
      %p50 = por %p48, %p49
      %p51 = scmp.ne.s32.totalorder %s40, %s41
      %p52 = scmp.eq.s32.totalorder %s20, 0
      %p53 = por %p51, %p52
      %p54 = scmp.ne.s32.totalorder %s40, %s41
      %p55 = scmp.eq.s32.totalorder %s21, 3
      %p56 = por %p54, %p55
      %p58 = scmp.ne.s32.totalorder %s41, %s57
      %p59 = scmp.eq.s32.totalorder %s21, 0
      %p60 = por %p58, %p59
      %s61 = ssub.s32 %s22, %s34
      %p62 = scmp.eq.s32.totalorder %s61, 0
      %s64 = sadd.s32 %s63, 1
      %s65 = scalar_select %p62, %s63, %s64
      %p68 = pneg %p62
      %p69 = scmp.eq.s32.totalorder %s15, 3
      %p70 = por %p68, %p69
      %p71 = scmp.ne.s32.totalorder %s63, %s66
      %p72 = scmp.eq.s32.totalorder %s15, 0
      %p73 = por %p71, %p72
      %p74 = scmp.ne.s32.totalorder %s63, %s66
      %p75 = scmp.eq.s32.totalorder %s20, 3
      %p76 = por %p74, %p75
      %p77 = scmp.ne.s32.totalorder %s66, %s67
      %p78 = scmp.eq.s32.totalorder %s20, 0
      %p79 = por %p77, %p78
      %p80 = scmp.ne.s32.totalorder %s66, %s67
      %p81 = scmp.eq.s32.totalorder %s21, 3
      %p82 = por %p80, %p81
      %p84 = scmp.ne.s32.totalorder %s67, %s83
      %p85 = scmp.eq.s32.totalorder %s21, 0
      %p86 = por %p84, %p85
      %s88 = sadd.s32 %s87, 1
      %p91 = scmp.eq.s32.totalorder %s15, 3
      %p92 = scmp.ne.s32.totalorder %s87, %s89
      %p93 = scmp.eq.s32.totalorder %s15, 0
      %p94 = por %p92, %p93
      %p95 = scmp.ne.s32.totalorder %s87, %s89
      %p96 = scmp.eq.s32.totalorder %s20, 3
      %p97 = por %p95, %p96
      %p98 = scmp.ne.s32.totalorder %s89, %s90
      %p99 = scmp.eq.s32.totalorder %s20, 0
      %p100 = por %p98, %p99
      %p101 = scmp.ne.s32.totalorder %s89, %s90
      %p102 = scmp.eq.s32.totalorder %s21, 3
      %p103 = por %p101, %p102
      %p105 = scmp.ne.s32.totalorder %s90, %s104
      %p106 = scmp.eq.s32.totalorder %s21, 0
      %p107 = por %p105, %p106
      %s109 = sadd.s32 %s108, 1
      %p112 = scmp.eq.s32.totalorder %s15, 3
      %p113 = scmp.ne.s32.totalorder %s108, %s110
      %p114 = scmp.eq.s32.totalorder %s15, 0
      %p115 = por %p113, %p114
      %p116 = scmp.ne.s32.totalorder %s108, %s110
      %p117 = scmp.eq.s32.totalorder %s20, 3
      %p118 = por %p116, %p117
      %p119 = scmp.ne.s32.totalorder %s110, %s111
      %p120 = scmp.eq.s32.totalorder %s20, 0
      %p121 = por %p119, %p120
      %p122 = scmp.ne.s32.totalorder %s110, %s111
      %p123 = scmp.eq.s32.totalorder %s21, 3
      %p124 = por %p122, %p123
      %p126 = scmp.ne.s32.totalorder %s111, %s125
      %p127 = scmp.eq.s32.totalorder %s21, 0
      %p128 = por %p126, %p127
      %s129 = ssub.s32 %s23, %s30
      %p130 = scmp.eq.s32.totalorder %s129, 0
      %s132 = sadd.s32 %s131, 1
      %s133 = scalar_select %p130, %s131, %s132
      %p136 = pneg %p130
      %p137 = scmp.eq.s32.totalorder %s15, 3
      %p138 = por %p136, %p137
      %p139 = scmp.ne.s32.totalorder %s131, %s134
      %p140 = scmp.eq.s32.totalorder %s15, 0
      %p141 = por %p139, %p140
      %p142 = scmp.ne.s32.totalorder %s131, %s134
      %p143 = scmp.eq.s32.totalorder %s20, 3
      %p144 = por %p142, %p143
      %p145 = scmp.ne.s32.totalorder %s134, %s135
      %p146 = scmp.eq.s32.totalorder %s20, 0
      %p147 = por %p145, %p146
      %p148 = scmp.ne.s32.totalorder %s134, %s135
      %p149 = scmp.eq.s32.totalorder %s21, 3
      %p150 = por %p148, %p149
      %p152 = scmp.ne.s32.totalorder %s135, %s151
      %p153 = scmp.eq.s32.totalorder %s21, 0
      %p154 = por %p152, %p153
      %s155 = ssub.s32 %s23, %s30
      %p156 = scmp.eq.s32.totalorder %s155, 0
      %s158 = sadd.s32 %s157, 1
      %s159 = scalar_select %p156, %s157, %s158
      %p162 = pneg %p156
      %p163 = scmp.eq.s32.totalorder %s15, 3
      %p164 = por %p162, %p163
      %p165 = scmp.ne.s32.totalorder %s157, %s160
      %p166 = scmp.eq.s32.totalorder %s15, 0
      %p167 = por %p165, %p166
      %p168 = scmp.ne.s32.totalorder %s157, %s160
      %p169 = scmp.eq.s32.totalorder %s20, 3
      %p170 = por %p168, %p169
      %p171 = scmp.ne.s32.totalorder %s160, %s161
      %p172 = scmp.eq.s32.totalorder %s20, 0
      %p173 = por %p171, %p172
      %p174 = scmp.ne.s32.totalorder %s160, %s161
      %p175 = scmp.eq.s32.totalorder %s21, 3
      %p176 = por %p174, %p175
      %p178 = scmp.ne.s32.totalorder %s161, %s177
      %p179 = scmp.eq.s32.totalorder %s21, 0
      %p180 = por %p178, %p179
      %s181 = ssub.s32 %s22, %s34
      %p182 = scmp.eq.s32.totalorder %s181, 0
      %s184 = sadd.s32 %s183, 1
      %s185 = scalar_select %p182, %s183, %s184
      %p188 = pneg %p182
      %p189 = scmp.eq.s32.totalorder %s15, 3
      %p190 = por %p188, %p189
      %p191 = scmp.ne.s32.totalorder %s183, %s186
      %p192 = scmp.eq.s32.totalorder %s15, 0
      %p193 = por %p191, %p192
      %p194 = scmp.ne.s32.totalorder %s183, %s186
      %p195 = scmp.eq.s32.totalorder %s20, 3
      %p196 = por %p194, %p195
      %p197 = scmp.ne.s32.totalorder %s186, %s187
      %p198 = scmp.eq.s32.totalorder %s20, 0
      %p199 = por %p197, %p198
      %p200 = scmp.ne.s32.totalorder %s186, %s187
      %p201 = scmp.eq.s32.totalorder %s21, 3
      %p202 = por %p200, %p201
      %p204 = scmp.ne.s32.totalorder %s187, %s203
      %p205 = scmp.eq.s32.totalorder %s21, 0
      %p206 = por %p204, %p205
      %p207 = scmp.le.s32.totalorder 1, %s15
      %p208 = scmp.lt.s32.totalorder %s15, 5
      %p209 = pnand %p207, %p208
      %p210 = pneg %p209
      // Predicated region
      $region9: #{tpu_custom_call.1} parent=5 // pred_check
        _
      $region10: #{tpu_custom_call.1} parent=5 // pred_check_branch
        %212 = sbr.rel (%p209) target = $region12
      $region11: #{tpu_custom_call.1} parent=5 // pred_region
        %s213 = ssub.s32 %s15, 1
        // Predicated region
        $region13: #{tpu_custom_call.1} parent=11 // pred_check
          %p214 = pneg %p100
        $region14: #{tpu_custom_call.1} parent=11 // pred_check_branch
          %216 = sbr.rel (%p214) target = $region16
        $region15: #{tpu_custom_call.1} parent=11 // pred_region
          _
        $region16: #{tpu_custom_call.1} parent=11 // pred_fallthru
          _
        // Predicated region
        $region17: #{tpu_custom_call.1} parent=11 // pred_check
          %p217 = pneg %p121
        $region18: #{tpu_custom_call.1} parent=11 // pred_check_branch
          %219 = sbr.rel (%p217) target = $region20
        $region19: #{tpu_custom_call.1} parent=11 // pred_region
          _
        $region20: #{tpu_custom_call.1} parent=11 // pred_fallthru
          _
      $region12: #{tpu_custom_call.1} parent=5 // pred_fallthru
        _
      %p220 = scmp.lt.s32.totalorder %s15, 4
      // Predicated region
      $region21: #{tpu_custom_call.1} parent=5 // pred_check
        %p221 = pneg %p220
      $region22: #{tpu_custom_call.1} parent=5 // pred_check_branch
        %223 = sbr.rel (%p221) target = $region24
      $region23: #{tpu_custom_call.1} parent=5 // pred_region
        // Predicated region
        $region25: #{tpu_custom_call.1} parent=23 // pred_check
          %p224 = pneg %p47
        $region26: #{tpu_custom_call.1} parent=23 // pred_check_branch
          %226 = sbr.rel (%p224) target = $region28
        $region27: #{tpu_custom_call.1} parent=23 // pred_region
          %p227 = scmp.lt.s32.totalorder %s22, 1
          %s228 = scalar_select %p227, %s22, 1
          %s229 = smul.addr %s228, 8
          %s230 = scalar_lea.vmem %s0, %s229
        $region28: #{tpu_custom_call.1} parent=23 // pred_fallthru
          _
        // Predicated region
        $region29: #{tpu_custom_call.1} parent=23 // pred_check
          %p231 = pneg %p73
        $region30: #{tpu_custom_call.1} parent=23 // pred_check_branch
          %233 = sbr.rel (%p231) target = $region32
        $region31: #{tpu_custom_call.1} parent=23 // pred_region
          %p234 = scmp.lt.s32.totalorder %s22, 1
          %s235 = scalar_select %p234, %s22, 1
          %s236 = smul.addr %s235, 8
          %s237 = scalar_lea.vmem %s1, %s236
        $region32: #{tpu_custom_call.1} parent=23 // pred_fallthru
          _
        // Predicated region
        $region33: #{tpu_custom_call.1} parent=23 // pred_check
          %p238 = pneg %p141
        $region34: #{tpu_custom_call.1} parent=23 // pred_check_branch
          %240 = sbr.rel (%p238) target = $region36
        $region35: #{tpu_custom_call.1} parent=23 // pred_region
          %p241 = scmp.lt.s32.totalorder %s23, 1
          %s242 = scalar_select %p241, %s23, 1
          %s243 = smul.addr %s242, 8
          %s244 = scalar_lea.vmem %s4, %s243
        $region36: #{tpu_custom_call.1} parent=23 // pred_fallthru
          _
        // Predicated region
        $region37: #{tpu_custom_call.1} parent=23 // pred_check
          %p245 = pneg %p167
        $region38: #{tpu_custom_call.1} parent=23 // pred_check_branch
          %247 = sbr.rel (%p245) target = $region40
        $region39: #{tpu_custom_call.1} parent=23 // pred_region
          %p248 = scmp.lt.s32.totalorder %s23, 1
          %s249 = scalar_select %p248, %s23, 1
          %s250 = smul.addr %s249, 8
          %s251 = scalar_lea.vmem %s5, %s250
        $region40: #{tpu_custom_call.1} parent=23 // pred_fallthru
          _
      $region24: #{tpu_custom_call.1} parent=5 // pred_fallthru
        _
      %p252 = scmp.le.s32.totalorder 1, %s15
      %p253 = scmp.lt.s32.totalorder %s15, 5
      %p254 = pnand %p252, %p253
      %p255 = pneg %p254
      // Predicated region
      $region41: #{tpu_custom_call.1} parent=5 // pred_check
        _
      $region42: #{tpu_custom_call.1} parent=5 // pred_check_branch
        %257 = sbr.rel (%p254) target = $region44
      $region43: #{tpu_custom_call.1} parent=5 // pred_region
        %s258 = ssub.s32 %s15, 1
        %p259 = scmp.lt.s32.totalorder %s24, 1
        %s260 = scalar_select %p259, %s24, 1
        %s261 = smul.addr %s260, 8
        %s262 = scalar_lea.vmem %s0, %s261
        %p263 = pneg %p53
        %p264 = pneg %p50
        %p265 = scmp.lt.s32.totalorder %s24, 1
        %s266 = scalar_select %p265, %s24, 1
        %s267 = smul.addr %s266, 8
        %s268 = scalar_lea.vmem %s1, %s267
        %p269 = pneg %p79
        %p270 = pneg %p76
        %p271 = pneg %p100
        %p272 = pneg %p97
        %p273 = pneg %p121
        %p274 = pneg %p118
        %p275 = scmp.lt.s32.totalorder %s25, 1
        %s276 = scalar_select %p275, %s25, 1
        %s277 = smul.addr %s276, 8
        %s278 = scalar_lea.vmem %s4, %s277
        %p279 = pneg %p147
        %p280 = pneg %p144
        %p281 = scmp.lt.s32.totalorder %s25, 1
        %s282 = scalar_select %p281, %s25, 1
        %s283 = smul.addr %s282, 8
        %s284 = scalar_lea.vmem %s5, %s283
        %p285 = pneg %p173
        %p286 = pneg %p170
        %p287 = pneg %p199
        %p288 = pneg %p196
        %s289 = sand.u32 %s186, 1
        %s290 = scalar_lea.sflag [#allocation7], %s289
        %s291 = sand.u32 %s186, 1
        %s292 = scalar_lea.vmem [#allocation6], %s291
        %p293 = scmp.lt.s32.totalorder %s24, 1
        %s294 = scalar_select %p293, %s24, 1
        %s295 = smul.addr %s294, 8
        %s296 = scalar_lea.vmem %s0, %s295
        %p297 = scmp.lt.s32.totalorder %s24, 1
        %s298 = scalar_select %p297, %s24, 1
        %s299 = smul.addr %s298, 8
        %s300 = scalar_lea.vmem %s1, %s299
        %p301 = scmp.lt.s32.totalorder %s25, 1
        %s302 = scalar_select %p301, %s25, 1
        %s303 = smul.addr %s302, 8
        %s304 = scalar_lea.vmem %s4, %s303
        %p305 = scmp.lt.s32.totalorder %s25, 1
        %s306 = scalar_select %p305, %s25, 1
        %s307 = smul.addr %s306, 8
        %s308 = scalar_lea.vmem %s5, %s307
        %s309 = smul.u32 %s24, 8
        %s310 = smul.u32 %s25, 8
        %v311 = vld [vmem:[%s296] sm:$0xff]
        %v312 = vld [vmem:[%s300] sm:$0xff]
        %v313 = vmul.f32 %v311, %v311
        %vm314 = vcmask 261120
        %v315 = vsel %vm314, %v313, 0.0
        %316 = vadd.xlane.f32.xlu0 %v315
        %v317 = vpop.xlane.xlu0 %316
        %p318 = scmp.eq.s32.totalorder %s25, 0
        // Predicated region
        $region45: #{tpu_custom_call.1} parent=43 // pred_check
          %p319 = pneg %p318
        $region46: #{tpu_custom_call.1} parent=43 // pred_check_branch
          %321 = sbr.rel (%p319) target = $region48
        $region47: #{tpu_custom_call.1} parent=43 // pred_region
          %v322 = vld [vmem:[%s2] sm:$0xff]
          %v323 = vld [vmem:[%s2 + $0x8] sm:$0xff]
          %v324 = vld [vmem:[%s3] sm:$0xff]
          %v325 = vld [vmem:[%s3 + $0x8] sm:$0xff]
          %v326 = vmul.f32 %v322, %v322
          %v327 = vmul.f32 %v323, %v323
          %v328 = vsel %vm314, %v326, 0.0
          %329 = vadd.xlane.f32.xlu0 %v328
          %v330 = vpop.xlane.xlu0 %329
          %v331 = vsel %vm314, %v327, 0.0
          %332 = vadd.xlane.f32.xlu0 %v331
          %v333 = vpop.xlane.xlu0 %332
          %v335 = vsel %vm314, %v311, 0
          %v338 = vsel %vm314, %v322, 0
          %v341 = vsel %vm314, %v323, 0
          %343 = vmatprep.subr.mxu0 0.0
          %344 = vmatpush1.xpose.msra.mxu0 %v338
          %345 = vmatprep.subr.mxu0 0.0
          %346 = vmatpush1.xpose.msra.mxu0 %v341
          %347 = vmatprep.subr.mxu0 0.0
          %348 = vmatpush1.xpose.msra.mxu0 0.0
          %349 = vmatprep.subr.mxu0 0.0
          %350 = vmatpush1.xpose.msra.mxu0 0.0
          %351 = vmatprep.subr.mxu0 0.0
          %352 = vmatpush1.xpose.msra.mxu0 0.0
          %353 = vmatprep.subr.mxu0 0.0
          %354 = vmatpush1.xpose.msra.mxu0 0.0
          %355 = vmatprep.subr.mxu0 0.0
          %356 = vmatpush1.xpose.msra.mxu0 0.0
          %357 = vmatprep.subr.mxu0 0.0
          %358 = vmatpush1.xpose.msra.mxu0 0.0
          %359 = vmatprep.subr.mxu0 0.0
          %360 = vmatpush1.xpose.msra.mxu0 0.0
          %361 = vmatprep.subr.mxu0 0.0
          %362 = vmatpush1.xpose.msra.mxu0 0.0
          %363 = vmatprep.subr.mxu0 0.0
          %364 = vmatpush1.xpose.msra.mxu0 0.0
          %365 = vmatprep.subr.mxu0 0.0
          %366 = vmatpush1.xpose.msra.mxu0 0.0
          %367 = vmatprep.subr.mxu0 0.0
          %368 = vmatpush1.xpose.msra.mxu0 0.0
          %369 = vmatprep.subr.mxu0 0.0
          %370 = vmatpush1.xpose.msra.mxu0 0.0
          %371 = vmatprep.subr.mxu0 0.0
          %372 = vmatpush1.xpose.msra.mxu0 0.0
          %373 = vmatprep.subr.mxu0 0.0
          %374 = vmatpush1.xpose.msra.mxu0 0.0
          %375 = vmatprep.subr.mxu0 0.0
          %376 = vmatpush1.xpose.msra.mxu0 0.0
          %377 = vmatprep.subr.mxu0 0.0
          %378 = vmatpush1.xpose.msra.mxu0 0.0
          %379 = vmatprep.subr.mxu0 0.0
          %380 = vmatpush1.xpose.msra.mxu0 0.0
          %381 = vmatprep.subr.mxu0 0.0
          %382 = vmatpush1.xpose.msra.mxu0 0.0
          %383 = vmatprep.subr.mxu0 0.0
          %384 = vmatpush1.xpose.msra.mxu0 0.0
          %385 = vmatprep.subr.mxu0 0.0
          %386 = vmatpush1.xpose.msra.mxu0 0.0
          %387 = vmatprep.subr.mxu0 0.0
          %388 = vmatpush1.xpose.msra.mxu0 0.0
          %389 = vmatprep.subr.mxu0 0.0
          %390 = vmatpush1.xpose.msra.mxu0 0.0
          %391 = vmatprep.subr.mxu0 0.0
          %392 = vmatpush1.xpose.msra.mxu0 0.0
          %393 = vmatprep.subr.mxu0 0.0
          %394 = vmatpush1.xpose.msra.mxu0 0.0
          %395 = vmatprep.subr.mxu0 0.0
          %396 = vmatpush1.xpose.msra.mxu0 0.0
          %397 = vmatprep.subr.mxu0 0.0
          %398 = vmatpush1.xpose.msra.mxu0 0.0
          %399 = vmatprep.subr.mxu0 0.0
          %400 = vmatpush1.xpose.msra.mxu0 0.0
          %401 = vmatprep.subr.mxu0 0.0
          %402 = vmatpush1.xpose.msra.mxu0 0.0
          %403 = vmatprep.subr.mxu0 0.0
          %404 = vmatpush1.xpose.msra.mxu0 0.0
          %405 = vmatprep.subr.mxu0 0.0
          %406 = vmatpush1.xpose.msra.mxu0 0.0
          %407 = vmatprep.mubr.f32.mxu0 0.0
          %408 = vmatmul.mubr.f32.gmra.mrb[0].mxu0 %v335
          %v409 = vpop.f32.mrb[0].mxu0
          %v410 = vadd.f32 0.0, %v409
          %v411 = vpop.f32.mrb[0].mxu0
          %412 = vdwg.mxu0
          %v415 = vlaneseq
          %v416 = vand.u32 %v415, 127
          %v417 = vlaneseq
          %v418 = vshrl.u32 %v417, 7
          %v419 = vsub.s32 %v416, %v418
          %v420 = vrot.slane %v330, %v419
          %v421 = vadd.s32 %v416, 4294967288
          %v422 = vlaneseq
          %v423 = vshrl.u32 %v422, 7
          %v424 = vsub.s32 %v421, %v423
          %v425 = vrot.slane %v333, %v424
          %vm426 = vcmask 130112
          %v427 = vsel %vm426, %v425, %v420
          %vm428 = vcmask 1041409
          %vm429 = vcmask 1042434
          %v430 = vsel %vm429, %v427, %v427
          %vm431 = vcmask 1043459
          %v432 = vsel %vm431, %v427, %v430
          %vm433 = vcmask 1044484
          %v434 = vsel %vm433, %v427, %v432
          %vm435 = vcmask 1045509
          %v436 = vsel %vm435, %v427, %v434
          %vm437 = vcmask 1046534
          %v438 = vsel %vm437, %v427, %v436
          %vm439 = vcmask 1047559
          %v440 = vsel %vm439, %v427, %v438
          %v442 = vadd.f32 %v317, %v440
          %v443 = vmul.f32 %v410, 2.0
          %v444 = vsub.f32 %v442, %v443
          %v445 = vlaneseq
          %v446 = vshrl.u32 %v445, 7
          %v447 = vstv %s309
          %v448 = vadd.s32 %v447, %v446
          %vm449 = vcmp.ne.s32.totalorder %v448, %v416
          %v450 = vmax.f32 %v444, 0.0
          %v451 = vsel %vm449, %v450, 0.0
          %v452 = vrsqrt.pop %v451
          %v453 = vmul.f32 %v451, %v452
          %vm454 = vcmp.eq.f32.partialorder %v451, inf
          %v455 = vsel %vm454, %v451, %v453
          %vm456 = vcmp.eq.f32.partialorder %v451, 0.0
          %v457 = vand.u32 %v451, 2147483648
          %v458 = vsel %vm456, %v457, %v455
          %v459 = vsub.f32 0.0, %v458
          %v460 = vmul.f32 %v459, 0.5
          %v462 = vcombine.high %v312, %v312
          %v464 = vunpack.c.l.s4 1966171168
          %v465 = vunpack.c.0.s8 %v464
          %v466 = vlaneseq
          %v467 = vshrl.u32 %v466, 7
          %v468 = vsub.s32 %v465, %v467
          %v469 = vrot.slane %v312, %v468
          %v471 = vunpack.c.l.s4 1966171168
          %v472 = vunpack.c.0.s8 %v471
          %v473 = vlaneseq
          %v474 = vshrl.u32 %v473, 7
          %v475 = vsub.s32 %v472, %v474
          %v476 = vrot.slane %v462, %v475
          %v477 = vcombine.high %v469, %v469
          %v478 = vcombine.high %v476, %v476
          %v480 = vunpack.c.l.s4 1966171168
          %v481 = vunpack.c.0.s8 %v480
          %v482 = vlaneseq
          %v483 = vshrl.u32 %v482, 7
          %v484 = vsub.s32 %v481, %v483
          %v485 = vrot.slane %v469, %v484
          %v487 = vunpack.c.l.s4 1966171168
          %v488 = vunpack.c.0.s8 %v487
          %v489 = vlaneseq
          %v490 = vshrl.u32 %v489, 7
          %v491 = vsub.s32 %v488, %v490
          %v492 = vrot.slane %v476, %v491
          %v494 = vunpack.c.l.s4 1966171168
          %v495 = vunpack.c.0.s8 %v494
          %v496 = vlaneseq
          %v497 = vshrl.u32 %v496, 7
          %v498 = vsub.s32 %v495, %v497
          %v499 = vrot.slane %v477, %v498
          %v501 = vunpack.c.l.s4 1966171168
          %v502 = vunpack.c.0.s8 %v501
          %v503 = vlaneseq
          %v504 = vshrl.u32 %v503, 7
          %v505 = vsub.s32 %v502, %v504
          %v506 = vrot.slane %v478, %v505
          %v507 = vcombine.high %v485, %v485
          %v508 = vcombine.high %v492, %v492
          %v509 = vcombine.high %v499, %v499
          %v510 = vcombine.high %v506, %v506
          %v511 = vlaneseq
          %v512 = vshrl.u32 %v511, 7
          %v513 = vsub.s32 0, %v512
          %v514 = vrot.slane %v485, %v513
          %v515 = vlaneseq
          %v516 = vshrl.u32 %v515, 7
          %v517 = vsub.s32 0, %v516
          %v518 = vrot.slane %v499, %v517
          %v519 = vlaneseq
          %v520 = vshrl.u32 %v519, 7
          %v521 = vsub.s32 0, %v520
          %v522 = vrot.slane %v507, %v521
          %v523 = vlaneseq
          %v524 = vshrl.u32 %v523, 7
          %v525 = vsub.s32 0, %v524
          %v526 = vrot.slane %v509, %v525
          %v527 = vlaneseq
          %v528 = vshrl.u32 %v527, 7
          %v529 = vsub.s32 0, %v528
          %v530 = vrot.slane %v492, %v529
          %v531 = vlaneseq
          %v532 = vshrl.u32 %v531, 7
          %v533 = vsub.s32 0, %v532
          %v534 = vrot.slane %v506, %v533
          %v535 = vlaneseq
          %v536 = vshrl.u32 %v535, 7
          %v537 = vsub.s32 0, %v536
          %v538 = vrot.slane %v508, %v537
          %v539 = vlaneseq
          %v540 = vshrl.u32 %v539, 7
          %v541 = vsub.s32 0, %v540
          %v542 = vrot.slane %v510, %v541
          %v551 = vsub.f32 %v514, %v324
          %v552 = vsub.f32 %v514, %v325
          %v553 = vsub.f32 %v518, %v324
          %v554 = vsub.f32 %v518, %v325
          %v555 = vsub.f32 %v522, %v324
          %v556 = vsub.f32 %v522, %v325
          %v557 = vsub.f32 %v526, %v324
          %v558 = vsub.f32 %v526, %v325
          %v559 = vsub.f32 %v530, %v324
          %v560 = vsub.f32 %v530, %v325
          %v561 = vsub.f32 %v534, %v324
          %v562 = vsub.f32 %v534, %v325
          %v563 = vsub.f32 %v538, %v324
          %v564 = vsub.f32 %v538, %v325
          %v565 = vsub.f32 %v542, %v324
          %v566 = vsub.f32 %v542, %v325
          %v567 = vand.u32 2147483647, %v551
          %v568 = vand.u32 2147483647, %v552
          %v569 = vand.u32 2147483647, %v553
          %v570 = vand.u32 2147483647, %v554
          %v571 = vand.u32 2147483647, %v555
          %v572 = vand.u32 2147483647, %v556
          %v573 = vand.u32 2147483647, %v557
          %v574 = vand.u32 2147483647, %v558
          %v575 = vand.u32 2147483647, %v559
          %v576 = vand.u32 2147483647, %v560
          %v577 = vand.u32 2147483647, %v561
          %v578 = vand.u32 2147483647, %v562
          %v579 = vand.u32 2147483647, %v563
          %v580 = vand.u32 2147483647, %v564
          %v581 = vand.u32 2147483647, %v565
          %v582 = vand.u32 2147483647, %v566
          %vm583 = vcmask 31744
          %v584 = vsel %vm583, %v567, 0.0
          %585 = vadd.xlane.f32.xlu0 %v584
          %v586 = vpop.xlane.xlu0 %585
          %v587 = vsel %vm583, %v568, 0.0
          %588 = vadd.xlane.f32.xlu0 %v587
          %v589 = vpop.xlane.xlu0 %588
          %v590 = vsel %vm583, %v569, 0.0
          %591 = vadd.xlane.f32.xlu0 %v590
          %v592 = vpop.xlane.xlu0 %591
          %v593 = vsel %vm583, %v570, 0.0
          %594 = vadd.xlane.f32.xlu0 %v593
          %v595 = vpop.xlane.xlu0 %594
          %v596 = vsel %vm583, %v571, 0.0
          %597 = vadd.xlane.f32.xlu0 %v596
          %v598 = vpop.xlane.xlu0 %597
          %v599 = vsel %vm583, %v572, 0.0
          %600 = vadd.xlane.f32.xlu0 %v599
          %v601 = vpop.xlane.xlu0 %600
          %v602 = vsel %vm583, %v573, 0.0
          %603 = vadd.xlane.f32.xlu0 %v602
          %v604 = vpop.xlane.xlu0 %603
          %v605 = vsel %vm583, %v574, 0.0
          %606 = vadd.xlane.f32.xlu0 %v605
          %v607 = vpop.xlane.xlu0 %606
          %v608 = vsel %vm583, %v575, 0.0
          %609 = vadd.xlane.f32.xlu0 %v608
          %v610 = vpop.xlane.xlu0 %609
          %v611 = vsel %vm583, %v576, 0.0
          %612 = vadd.xlane.f32.xlu0 %v611
          %v613 = vpop.xlane.xlu0 %612
          %v614 = vsel %vm583, %v577, 0.0
          %615 = vadd.xlane.f32.xlu0 %v614
          %v616 = vpop.xlane.xlu0 %615
          %v617 = vsel %vm583, %v578, 0.0
          %618 = vadd.xlane.f32.xlu0 %v617
          %v619 = vpop.xlane.xlu0 %618
          %v620 = vsel %vm583, %v579, 0.0
          %621 = vadd.xlane.f32.xlu0 %v620
          %v622 = vpop.xlane.xlu0 %621
          %v623 = vsel %vm583, %v580, 0.0
          %624 = vadd.xlane.f32.xlu0 %v623
          %v625 = vpop.xlane.xlu0 %624
          %v626 = vsel %vm583, %v581, 0.0
          %627 = vadd.xlane.f32.xlu0 %v626
          %v628 = vpop.xlane.xlu0 %627
          %v629 = vsel %vm583, %v582, 0.0
          %630 = vadd.xlane.f32.xlu0 %v629
          %v631 = vpop.xlane.xlu0 %630
          %vm632 = vcmask 130048
          %v633 = vsel %vm632, %v460, -inf
          %634 = vmax.xlane.f32.xlu0 %v633
          %v635 = vpop.xlane.xlu0 %634
          %v636 = vsub.f32 %v460, %v635
          %v637 = vmul.f32 %v636, 1.442695
          %v638 = vpow.pop %v637
          %v639 = vsel %vm632, %v638, 0.0
          %640 = vadd.xlane.f32.xlu0 %v639
          %v641 = vpop.xlane.xlu0 %640
          %v658 = vlaneseq
          %v659 = vshrl.u32 %v658, 7
          %v660 = vsub.s32 %v416, %v659
          %v661 = vrot.slane %v586, %v660
          %v662 = vlaneseq
          %v663 = vshrl.u32 %v662, 7
          %v664 = vsub.s32 %v421, %v663
          %v665 = vrot.slane %v589, %v664
          %v666 = vsel %vm426, %v665, %v661
          %v667 = vlaneseq
          %v668 = vshrl.u32 %v667, 7
          %v669 = vsub.s32 %v416, %v668
          %v670 = vrot.slane %v592, %v669
          %v671 = vlaneseq
          %v672 = vshrl.u32 %v671, 7
          %v673 = vsub.s32 %v421, %v672
          %v674 = vrot.slane %v595, %v673
          %v675 = vsel %vm426, %v674, %v670
          %v676 = vlaneseq
          %v677 = vshrl.u32 %v676, 7
          %v678 = vsub.s32 %v416, %v677
          %v679 = vrot.slane %v598, %v678
          %v680 = vlaneseq
          %v681 = vshrl.u32 %v680, 7
          %v682 = vsub.s32 %v421, %v681
          %v683 = vrot.slane %v601, %v682
          %v684 = vsel %vm426, %v683, %v679
          %v685 = vlaneseq
          %v686 = vshrl.u32 %v685, 7
          %v687 = vsub.s32 %v416, %v686
          %v688 = vrot.slane %v604, %v687
          %v689 = vlaneseq
          %v690 = vshrl.u32 %v689, 7
          %v691 = vsub.s32 %v421, %v690
          %v692 = vrot.slane %v607, %v691
          %v693 = vsel %vm426, %v692, %v688
          %v694 = vlaneseq
          %v695 = vshrl.u32 %v694, 7
          %v696 = vsub.s32 %v416, %v695
          %v697 = vrot.slane %v610, %v696
          %v698 = vlaneseq
          %v699 = vshrl.u32 %v698, 7
          %v700 = vsub.s32 %v421, %v699
          %v701 = vrot.slane %v613, %v700
          %v702 = vsel %vm426, %v701, %v697
          %v703 = vlaneseq
          %v704 = vshrl.u32 %v703, 7
          %v705 = vsub.s32 %v416, %v704
          %v706 = vrot.slane %v616, %v705
          %v707 = vlaneseq
          %v708 = vshrl.u32 %v707, 7
          %v709 = vsub.s32 %v421, %v708
          %v710 = vrot.slane %v619, %v709
          %v711 = vsel %vm426, %v710, %v706
          %v712 = vlaneseq
          %v713 = vshrl.u32 %v712, 7
          %v714 = vsub.s32 %v416, %v713
          %v715 = vrot.slane %v622, %v714
          %v716 = vlaneseq
          %v717 = vshrl.u32 %v716, 7
          %v718 = vsub.s32 %v421, %v717
          %v719 = vrot.slane %v625, %v718
          %v720 = vsel %vm426, %v719, %v715
          %v721 = vlaneseq
          %v722 = vshrl.u32 %v721, 7
          %v723 = vsub.s32 %v416, %v722
          %v724 = vrot.slane %v628, %v723
          %v725 = vlaneseq
          %v726 = vshrl.u32 %v725, 7
          %v727 = vsub.s32 %v421, %v726
          %v728 = vrot.slane %v631, %v727
          %v729 = vsel %vm426, %v728, %v724
          %v730 = vsel %vm428, %v675, %v666
          %v731 = vsel %vm429, %v684, %v730
          %v732 = vsel %vm431, %v693, %v731
          %v733 = vsel %vm433, %v702, %v732
          %v734 = vsel %vm435, %v711, %v733
          %v735 = vsel %vm437, %v720, %v734
          %v736 = vsel %vm439, %v729, %v735
          %738 = vst.msk [vmem:[#allocation2] sm:$0xff] %vm632, %v736
          %v739 = vsel %vm449, %v638, 0.0
          %740 = vst.msk [vmem:[#allocation3] sm:$0xff] %vm632, %v739
          %vm741 = vcmask 7168
          %742 = vst.msk [vmem:[#allocation4] sm:$0xff] %vm741, %v641
          %743 = vst.msk [vmem:[#allocation5] sm:$0xff] %vm741, %v635
          %744 = vst [vmem:[%s292] sm:$0x1] 0.0
        $region48: #{tpu_custom_call.1} parent=43 // pred_fallthru
          _
        %v745 = vld [vmem:[%s304] sm:$0xff]
        %v746 = vld [vmem:[%s308] sm:$0xff]
        %v747 = vmul.f32 %v745, %v745
        %v748 = vsel %vm314, %v747, 0.0
        %749 = vadd.xlane.f32.xlu0 %v748
        %v750 = vpop.xlane.xlu0 %749
        %v752 = vsel %vm314, %v311, 0
        %v755 = vsel %vm314, %v745, 0
        %757 = vmatprep.subr.mxu0 0.0
        %758 = vmatpush1.xpose.msra.mxu0 %v755
        %759 = vmatprep.subr.mxu0 0.0
        %760 = vmatpush1.xpose.msra.mxu0 0.0
        %761 = vmatprep.subr.mxu0 0.0
        %762 = vmatpush1.xpose.msra.mxu0 0.0
        %763 = vmatprep.subr.mxu0 0.0
        %764 = vmatpush1.xpose.msra.mxu0 0.0
        %765 = vmatprep.subr.mxu0 0.0
        %766 = vmatpush1.xpose.msra.mxu0 0.0
        %767 = vmatprep.subr.mxu0 0.0
        %768 = vmatpush1.xpose.msra.mxu0 0.0
        %769 = vmatprep.subr.mxu0 0.0
        %770 = vmatpush1.xpose.msra.mxu0 0.0
        %771 = vmatprep.subr.mxu0 0.0
        %772 = vmatpush1.xpose.msra.mxu0 0.0
        %773 = vmatprep.subr.mxu0 0.0
        %774 = vmatpush1.xpose.msra.mxu0 0.0
        %775 = vmatprep.subr.mxu0 0.0
        %776 = vmatpush1.xpose.msra.mxu0 0.0
        %777 = vmatprep.subr.mxu0 0.0
        %778 = vmatpush1.xpose.msra.mxu0 0.0
        %779 = vmatprep.subr.mxu0 0.0
        %780 = vmatpush1.xpose.msra.mxu0 0.0
        %781 = vmatprep.subr.mxu0 0.0
        %782 = vmatpush1.xpose.msra.mxu0 0.0
        %783 = vmatprep.subr.mxu0 0.0
        %784 = vmatpush1.xpose.msra.mxu0 0.0
        %785 = vmatprep.subr.mxu0 0.0
        %786 = vmatpush1.xpose.msra.mxu0 0.0
        %787 = vmatprep.subr.mxu0 0.0
        %788 = vmatpush1.xpose.msra.mxu0 0.0
        %789 = vmatprep.subr.mxu0 0.0
        %790 = vmatpush1.xpose.msra.mxu0 0.0
        %791 = vmatprep.subr.mxu0 0.0
        %792 = vmatpush1.xpose.msra.mxu0 0.0
        %793 = vmatprep.subr.mxu0 0.0
        %794 = vmatpush1.xpose.msra.mxu0 0.0
        %795 = vmatprep.subr.mxu0 0.0
        %796 = vmatpush1.xpose.msra.mxu0 0.0
        %797 = vmatprep.subr.mxu0 0.0
        %798 = vmatpush1.xpose.msra.mxu0 0.0
        %799 = vmatprep.subr.mxu0 0.0
        %800 = vmatpush1.xpose.msra.mxu0 0.0
        %801 = vmatprep.subr.mxu0 0.0
        %802 = vmatpush1.xpose.msra.mxu0 0.0
        %803 = vmatprep.subr.mxu0 0.0
        %804 = vmatpush1.xpose.msra.mxu0 0.0
        %805 = vmatprep.subr.mxu0 0.0
        %806 = vmatpush1.xpose.msra.mxu0 0.0
        %807 = vmatprep.subr.mxu0 0.0
        %808 = vmatpush1.xpose.msra.mxu0 0.0
        %809 = vmatprep.subr.mxu0 0.0
        %810 = vmatpush1.xpose.msra.mxu0 0.0
        %811 = vmatprep.subr.mxu0 0.0
        %812 = vmatpush1.xpose.msra.mxu0 0.0
        %813 = vmatprep.subr.mxu0 0.0
        %814 = vmatpush1.xpose.msra.mxu0 0.0
        %815 = vmatprep.subr.mxu0 0.0
        %816 = vmatpush1.xpose.msra.mxu0 0.0
        %817 = vmatprep.subr.mxu0 0.0
        %818 = vmatpush1.xpose.msra.mxu0 0.0
        %819 = vmatprep.subr.mxu0 0.0
        %820 = vmatpush1.xpose.msra.mxu0 0.0
        %821 = vmatprep.mubr.f32.mxu0 0.0
        %822 = vmatmul.mubr.f32.gmra.mrb[0].mxu0 %v752
        %v823 = vpop.f32.mrb[0].mxu0
        %v824 = vadd.f32 0.0, %v823
        %v825 = vpop.f32.mrb[0].mxu0
        %826 = vdwg.mxu0
        %v828 = vlaneseq
        %v829 = vand.u32 %v828, 127
        %v830 = vlaneseq
        %v831 = vshrl.u32 %v830, 7
        %v832 = vsub.s32 %v829, %v831
        %v833 = vrot.slane %v750, %v832
        %vm834 = vcmask 1041409
        %vm835 = vcmask 1042434
        %v836 = vsel %vm835, %v833, %v833
        %vm837 = vcmask 1043459
        %v838 = vsel %vm837, %v833, %v836
        %vm839 = vcmask 1044484
        %v840 = vsel %vm839, %v833, %v838
        %vm841 = vcmask 1045509
        %v842 = vsel %vm841, %v833, %v840
        %vm843 = vcmask 1046534
        %v844 = vsel %vm843, %v833, %v842
        %vm845 = vcmask 1047559
        %v846 = vsel %vm845, %v833, %v844
        %v848 = vadd.f32 %v317, %v846
        %v849 = vmul.f32 %v824, 2.0
        %v850 = vsub.f32 %v848, %v849
        %v851 = vlaneseq
        %v852 = vshrl.u32 %v851, 7
        %v853 = vstv %s309
        %v854 = vadd.s32 %v853, %v852
        %v855 = vstv %s310
        %v856 = vadd.s32 %v855, %v829
        %vm857 = vcmp.ne.s32.totalorder %v854, %v856
        %v858 = vmax.f32 %v850, 0.0
        %v859 = vsel %vm857, %v858, 0.0
        %v860 = vrsqrt.pop %v859
        %v861 = vmul.f32 %v859, %v860
        %vm862 = vcmp.eq.f32.partialorder %v859, inf
        %v863 = vsel %vm862, %v859, %v861
        %vm864 = vcmp.eq.f32.partialorder %v859, 0.0
        %v865 = vand.u32 %v859, 2147483648
        %v866 = vsel %vm864, %v865, %v863
        %v867 = vsub.f32 0.0, %v866
        %v868 = vmul.f32 %v867, 0.5
        %v869 = vld [vmem:[#allocation5] sm:$0xff]
        %871 = vset.pattern.permute.xlu0 0
        %872 = vperm.xlu0 %871, %v869
        %v873 = vpop.permute.xlu0 %872
        %v875 = vsub.f32 %v868, %v873
        %v877 = vcombine.high %v312, %v312
        %v879 = vunpack.c.l.s4 1966171168
        %v880 = vunpack.c.0.s8 %v879
        %v881 = vlaneseq
        %v882 = vshrl.u32 %v881, 7
        %v883 = vsub.s32 %v880, %v882
        %v884 = vrot.slane %v312, %v883
        %v886 = vunpack.c.l.s4 1966171168
        %v887 = vunpack.c.0.s8 %v886
        %v888 = vlaneseq
        %v889 = vshrl.u32 %v888, 7
        %v890 = vsub.s32 %v887, %v889
        %v891 = vrot.slane %v877, %v890
        %v892 = vcombine.high %v884, %v884
        %v893 = vcombine.high %v891, %v891
        %v895 = vunpack.c.l.s4 1966171168
        %v896 = vunpack.c.0.s8 %v895
        %v897 = vlaneseq
        %v898 = vshrl.u32 %v897, 7
        %v899 = vsub.s32 %v896, %v898
        %v900 = vrot.slane %v884, %v899
        %v902 = vunpack.c.l.s4 1966171168
        %v903 = vunpack.c.0.s8 %v902
        %v904 = vlaneseq
        %v905 = vshrl.u32 %v904, 7
        %v906 = vsub.s32 %v903, %v905
        %v907 = vrot.slane %v891, %v906
        %v909 = vunpack.c.l.s4 1966171168
        %v910 = vunpack.c.0.s8 %v909
        %v911 = vlaneseq
        %v912 = vshrl.u32 %v911, 7
        %v913 = vsub.s32 %v910, %v912
        %v914 = vrot.slane %v892, %v913
        %v916 = vunpack.c.l.s4 1966171168
        %v917 = vunpack.c.0.s8 %v916
        %v918 = vlaneseq
        %v919 = vshrl.u32 %v918, 7
        %v920 = vsub.s32 %v917, %v919
        %v921 = vrot.slane %v893, %v920
        %v922 = vcombine.high %v900, %v900
        %v923 = vcombine.high %v907, %v907
        %v924 = vcombine.high %v914, %v914
        %v925 = vcombine.high %v921, %v921
        %v926 = vlaneseq
        %v927 = vshrl.u32 %v926, 7
        %v928 = vsub.s32 0, %v927
        %v929 = vrot.slane %v900, %v928
        %v930 = vlaneseq
        %v931 = vshrl.u32 %v930, 7
        %v932 = vsub.s32 0, %v931
        %v933 = vrot.slane %v914, %v932
        %v934 = vlaneseq
        %v935 = vshrl.u32 %v934, 7
        %v936 = vsub.s32 0, %v935
        %v937 = vrot.slane %v922, %v936
        %v938 = vlaneseq
        %v939 = vshrl.u32 %v938, 7
        %v940 = vsub.s32 0, %v939
        %v941 = vrot.slane %v924, %v940
        %v942 = vlaneseq
        %v943 = vshrl.u32 %v942, 7
        %v944 = vsub.s32 0, %v943
        %v945 = vrot.slane %v907, %v944
        %v946 = vlaneseq
        %v947 = vshrl.u32 %v946, 7
        %v948 = vsub.s32 0, %v947
        %v949 = vrot.slane %v921, %v948
        %v950 = vlaneseq
        %v951 = vshrl.u32 %v950, 7
        %v952 = vsub.s32 0, %v951
        %v953 = vrot.slane %v923, %v952
        %v954 = vlaneseq
        %v955 = vshrl.u32 %v954, 7
        %v956 = vsub.s32 0, %v955
        %v957 = vrot.slane %v925, %v956
        %v966 = vsub.f32 %v929, %v746
        %v967 = vsub.f32 %v933, %v746
        %v968 = vsub.f32 %v937, %v746
        %v969 = vsub.f32 %v941, %v746
        %v970 = vsub.f32 %v945, %v746
        %v971 = vsub.f32 %v949, %v746
        %v972 = vsub.f32 %v953, %v746
        %v973 = vsub.f32 %v957, %v746
        %v974 = vand.u32 2147483647, %v966
        %v975 = vand.u32 2147483647, %v967
        %v976 = vand.u32 2147483647, %v968
        %v977 = vand.u32 2147483647, %v969
        %v978 = vand.u32 2147483647, %v970
        %v979 = vand.u32 2147483647, %v971
        %v980 = vand.u32 2147483647, %v972
        %v981 = vand.u32 2147483647, %v973
        %vm982 = vcmask 31744
        %v983 = vsel %vm982, %v974, 0.0
        %984 = vadd.xlane.f32.xlu0 %v983
        %v985 = vpop.xlane.xlu0 %984
        %v986 = vsel %vm982, %v975, 0.0
        %987 = vadd.xlane.f32.xlu0 %v986
        %v988 = vpop.xlane.xlu0 %987
        %v989 = vsel %vm982, %v976, 0.0
        %990 = vadd.xlane.f32.xlu0 %v989
        %v991 = vpop.xlane.xlu0 %990
        %v992 = vsel %vm982, %v977, 0.0
        %993 = vadd.xlane.f32.xlu0 %v992
        %v994 = vpop.xlane.xlu0 %993
        %v995 = vsel %vm982, %v978, 0.0
        %996 = vadd.xlane.f32.xlu0 %v995
        %v997 = vpop.xlane.xlu0 %996
        %v998 = vsel %vm982, %v979, 0.0
        %999 = vadd.xlane.f32.xlu0 %v998
        %v1000 = vpop.xlane.xlu0 %999
        %v1001 = vsel %vm982, %v980, 0.0
        %1002 = vadd.xlane.f32.xlu0 %v1001
        %v1003 = vpop.xlane.xlu0 %1002
        %v1004 = vsel %vm982, %v981, 0.0
        %1005 = vadd.xlane.f32.xlu0 %v1004
        %v1006 = vpop.xlane.xlu0 %1005
        %v1007 = vld [vmem:[#allocation2] sm:$0xff]
        %v1008 = vld [vmem:[#allocation3] sm:$0xff]
        %v1010 = vcombine.high %v1007, %v1007
        %v1012 = vunpack.c.l.s4 1966171168
        %v1013 = vunpack.c.0.s8 %v1012
        %v1014 = vlaneseq
        %v1015 = vshrl.u32 %v1014, 7
        %v1016 = vsub.s32 %v1013, %v1015
        %v1017 = vrot.slane %v1007, %v1016
        %v1019 = vunpack.c.l.s4 1966171168
        %v1020 = vunpack.c.0.s8 %v1019
        %v1021 = vlaneseq
        %v1022 = vshrl.u32 %v1021, 7
        %v1023 = vsub.s32 %v1020, %v1022
        %v1024 = vrot.slane %v1010, %v1023
        %v1025 = vcombine.high %v1017, %v1017
        %v1026 = vcombine.high %v1024, %v1024
        %v1028 = vunpack.c.l.s4 1966171168
        %v1029 = vunpack.c.0.s8 %v1028
        %v1030 = vlaneseq
        %v1031 = vshrl.u32 %v1030, 7
        %v1032 = vsub.s32 %v1029, %v1031
        %v1033 = vrot.slane %v1017, %v1032
        %v1035 = vunpack.c.l.s4 1966171168
        %v1036 = vunpack.c.0.s8 %v1035
        %v1037 = vlaneseq
        %v1038 = vshrl.u32 %v1037, 7
        %v1039 = vsub.s32 %v1036, %v1038
        %v1040 = vrot.slane %v1024, %v1039
        %v1042 = vunpack.c.l.s4 1966171168
        %v1043 = vunpack.c.0.s8 %v1042
        %v1044 = vlaneseq
        %v1045 = vshrl.u32 %v1044, 7
        %v1046 = vsub.s32 %v1043, %v1045
        %v1047 = vrot.slane %v1025, %v1046
        %v1049 = vunpack.c.l.s4 1966171168
        %v1050 = vunpack.c.0.s8 %v1049
        %v1051 = vlaneseq
        %v1052 = vshrl.u32 %v1051, 7
        %v1053 = vsub.s32 %v1050, %v1052
        %v1054 = vrot.slane %v1026, %v1053
        %v1055 = vcombine.high %v1033, %v1033
        %v1056 = vcombine.high %v1040, %v1040
        %v1057 = vcombine.high %v1047, %v1047
        %v1058 = vcombine.high %v1054, %v1054
        %v1059 = vlaneseq
        %v1060 = vshrl.u32 %v1059, 7
        %v1061 = vsub.s32 0, %v1060
        %v1062 = vrot.slane %v1033, %v1061
        %v1063 = vlaneseq
        %v1064 = vshrl.u32 %v1063, 7
        %v1065 = vsub.s32 0, %v1064
        %v1066 = vrot.slane %v1047, %v1065
        %v1067 = vlaneseq
        %v1068 = vshrl.u32 %v1067, 7
        %v1069 = vsub.s32 0, %v1068
        %v1070 = vrot.slane %v1055, %v1069
        %v1071 = vlaneseq
        %v1072 = vshrl.u32 %v1071, 7
        %v1073 = vsub.s32 0, %v1072
        %v1074 = vrot.slane %v1057, %v1073
        %v1075 = vlaneseq
        %v1076 = vshrl.u32 %v1075, 7
        %v1077 = vsub.s32 0, %v1076
        %v1078 = vrot.slane %v1040, %v1077
        %v1079 = vlaneseq
        %v1080 = vshrl.u32 %v1079, 7
        %v1081 = vsub.s32 0, %v1080
        %v1082 = vrot.slane %v1054, %v1081
        %v1083 = vlaneseq
        %v1084 = vshrl.u32 %v1083, 7
        %v1085 = vsub.s32 0, %v1084
        %v1086 = vrot.slane %v1056, %v1085
        %v1087 = vlaneseq
        %v1088 = vshrl.u32 %v1087, 7
        %v1089 = vsub.s32 0, %v1088
        %v1090 = vrot.slane %v1058, %v1089
        %vm1099 = vcmp.ge.f32.partialorder %v1062, %v985
        %vm1100 = vcmp.ge.f32.partialorder %v1066, %v988
        %vm1101 = vcmp.ge.f32.partialorder %v1070, %v991
        %vm1102 = vcmp.ge.f32.partialorder %v1074, %v994
        %vm1103 = vcmp.ge.f32.partialorder %v1078, %v997
        %vm1104 = vcmp.ge.f32.partialorder %v1082, %v1000
        %vm1105 = vcmp.ge.f32.partialorder %v1086, %v1003
        %vm1106 = vcmp.ge.f32.partialorder %v1090, %v1006
        %v1108 = vcombine.high %v1008, %v1008
        %v1110 = vunpack.c.l.s4 1966171168
        %v1111 = vunpack.c.0.s8 %v1110
        %v1112 = vlaneseq
        %v1113 = vshrl.u32 %v1112, 7
        %v1114 = vsub.s32 %v1111, %v1113
        %v1115 = vrot.slane %v1008, %v1114
        %v1117 = vunpack.c.l.s4 1966171168
        %v1118 = vunpack.c.0.s8 %v1117
        %v1119 = vlaneseq
        %v1120 = vshrl.u32 %v1119, 7
        %v1121 = vsub.s32 %v1118, %v1120
        %v1122 = vrot.slane %v1108, %v1121
        %v1123 = vcombine.high %v1115, %v1115
        %v1124 = vcombine.high %v1122, %v1122
        %v1126 = vunpack.c.l.s4 1966171168
        %v1127 = vunpack.c.0.s8 %v1126
        %v1128 = vlaneseq
        %v1129 = vshrl.u32 %v1128, 7
        %v1130 = vsub.s32 %v1127, %v1129
        %v1131 = vrot.slane %v1115, %v1130
        %v1133 = vunpack.c.l.s4 1966171168
        %v1134 = vunpack.c.0.s8 %v1133
        %v1135 = vlaneseq
        %v1136 = vshrl.u32 %v1135, 7
        %v1137 = vsub.s32 %v1134, %v1136
        %v1138 = vrot.slane %v1122, %v1137
        %v1140 = vunpack.c.l.s4 1966171168
        %v1141 = vunpack.c.0.s8 %v1140
        %v1142 = vlaneseq
        %v1143 = vshrl.u32 %v1142, 7
        %v1144 = vsub.s32 %v1141, %v1143
        %v1145 = vrot.slane %v1123, %v1144
        %v1147 = vunpack.c.l.s4 1966171168
        %v1148 = vunpack.c.0.s8 %v1147
        %v1149 = vlaneseq
        %v1150 = vshrl.u32 %v1149, 7
        %v1151 = vsub.s32 %v1148, %v1150
        %v1152 = vrot.slane %v1124, %v1151
        %v1153 = vcombine.high %v1131, %v1131
        %v1154 = vcombine.high %v1138, %v1138
        %v1155 = vcombine.high %v1145, %v1145
        %v1156 = vcombine.high %v1152, %v1152
        %v1157 = vlaneseq
        %v1158 = vshrl.u32 %v1157, 7
        %v1159 = vsub.s32 0, %v1158
        %v1160 = vrot.slane %v1131, %v1159
        %v1161 = vlaneseq
        %v1162 = vshrl.u32 %v1161, 7
        %v1163 = vsub.s32 0, %v1162
        %v1164 = vrot.slane %v1145, %v1163
        %v1165 = vlaneseq
        %v1166 = vshrl.u32 %v1165, 7
        %v1167 = vsub.s32 0, %v1166
        %v1168 = vrot.slane %v1153, %v1167
        %v1169 = vlaneseq
        %v1170 = vshrl.u32 %v1169, 7
        %v1171 = vsub.s32 0, %v1170
        %v1172 = vrot.slane %v1155, %v1171
        %v1173 = vlaneseq
        %v1174 = vshrl.u32 %v1173, 7
        %v1175 = vsub.s32 0, %v1174
        %v1176 = vrot.slane %v1138, %v1175
        %v1177 = vlaneseq
        %v1178 = vshrl.u32 %v1177, 7
        %v1179 = vsub.s32 0, %v1178
        %v1180 = vrot.slane %v1152, %v1179
        %v1181 = vlaneseq
        %v1182 = vshrl.u32 %v1181, 7
        %v1183 = vsub.s32 0, %v1182
        %v1184 = vrot.slane %v1154, %v1183
        %v1185 = vlaneseq
        %v1186 = vshrl.u32 %v1185, 7
        %v1187 = vsub.s32 0, %v1186
        %v1188 = vrot.slane %v1156, %v1187
        %v1197 = vsel %vm1099, %v1160, 0.0
        %v1198 = vsel %vm1100, %v1164, 0.0
        %v1199 = vsel %vm1101, %v1168, 0.0
        %v1200 = vsel %vm1102, %v1172, 0.0
        %v1201 = vsel %vm1103, %v1176, 0.0
        %v1202 = vsel %vm1104, %v1180, 0.0
        %v1203 = vsel %vm1105, %v1184, 0.0
        %v1204 = vsel %vm1106, %v1188, 0.0
        %vm1205 = vcmask 130048
        %v1206 = vsel %vm1205, %v1197, 0.0
        %1207 = vadd.xlane.f32.xlu0 %v1206
        %v1208 = vpop.xlane.xlu0 %1207
        %v1209 = vsel %vm1205, %v1198, 0.0
        %1210 = vadd.xlane.f32.xlu0 %v1209
        %v1211 = vpop.xlane.xlu0 %1210
        %v1212 = vsel %vm1205, %v1199, 0.0
        %1213 = vadd.xlane.f32.xlu0 %v1212
        %v1214 = vpop.xlane.xlu0 %1213
        %v1215 = vsel %vm1205, %v1200, 0.0
        %1216 = vadd.xlane.f32.xlu0 %v1215
        %v1217 = vpop.xlane.xlu0 %1216
        %v1218 = vsel %vm1205, %v1201, 0.0
        %1219 = vadd.xlane.f32.xlu0 %v1218
        %v1220 = vpop.xlane.xlu0 %1219
        %v1221 = vsel %vm1205, %v1202, 0.0
        %1222 = vadd.xlane.f32.xlu0 %v1221
        %v1223 = vpop.xlane.xlu0 %1222
        %v1224 = vsel %vm1205, %v1203, 0.0
        %1225 = vadd.xlane.f32.xlu0 %v1224
        %v1226 = vpop.xlane.xlu0 %1225
        %v1227 = vsel %vm1205, %v1204, 0.0
        %1228 = vadd.xlane.f32.xlu0 %v1227
        %v1229 = vpop.xlane.xlu0 %1228
        %v1230 = vld [vmem:[#allocation4] sm:$0xff]
        %v1231 = vmul.f32 %v1230, 1e-07
        %1233 = vset.pattern.permute.xlu0 0
        %1234 = vperm.xlu0 %1233, %v1231
        %v1235 = vpop.permute.xlu0 %1234
        %v1236 = vlaneseq
        %v1237 = vshrl.u32 %v1236, 7
        %v1238 = vsub.s32 0, %v1237
        %v1239 = vrot.slane %v1235, %v1238
        %v1240 = vlaneseq
        %v1241 = vshrl.u32 %v1240, 7
        %v1242 = vsub.s32 1, %v1241
        %v1243 = vrot.slane %v1235, %v1242
        %v1244 = vlaneseq
        %v1245 = vshrl.u32 %v1244, 7
        %v1246 = vsub.s32 2, %v1245
        %v1247 = vrot.slane %v1235, %v1246
        %v1248 = vlaneseq
        %v1249 = vshrl.u32 %v1248, 7
        %v1250 = vsub.s32 3, %v1249
        %v1251 = vrot.slane %v1235, %v1250
        %v1252 = vlaneseq
        %v1253 = vshrl.u32 %v1252, 7
        %v1254 = vsub.s32 4, %v1253
        %v1255 = vrot.slane %v1235, %v1254
        %v1256 = vlaneseq
        %v1257 = vshrl.u32 %v1256, 7
        %v1258 = vsub.s32 5, %v1257
        %v1259 = vrot.slane %v1235, %v1258
        %v1260 = vlaneseq
        %v1261 = vshrl.u32 %v1260, 7
        %v1262 = vsub.s32 6, %v1261
        %v1263 = vrot.slane %v1235, %v1262
        %v1264 = vlaneseq
        %v1265 = vshrl.u32 %v1264, 7
        %v1266 = vsub.s32 7, %v1265
        %v1267 = vrot.slane %v1235, %v1266
        %v1276 = vadd.f32 %v1208, %v1239
        %v1277 = vadd.f32 %v1211, %v1243
        %v1278 = vadd.f32 %v1214, %v1247
        %v1279 = vadd.f32 %v1217, %v1251
        %v1280 = vadd.f32 %v1220, %v1255
        %v1281 = vadd.f32 %v1223, %v1259
        %v1282 = vadd.f32 %v1226, %v1263
        %v1283 = vadd.f32 %v1229, %v1267
        %v1284 = vlog2.pop %v1276
        %v1285 = vmul.f32 %v1284, 0.6931472
        %v1286 = vlog2.pop %v1277
        %v1287 = vmul.f32 %v1286, 0.6931472
        %v1288 = vlog2.pop %v1278
        %v1289 = vmul.f32 %v1288, 0.6931472
        %v1290 = vlog2.pop %v1279
        %v1291 = vmul.f32 %v1290, 0.6931472
        %v1292 = vlog2.pop %v1280
        %v1293 = vmul.f32 %v1292, 0.6931472
        %v1294 = vlog2.pop %v1281
        %v1295 = vmul.f32 %v1294, 0.6931472
        %v1296 = vlog2.pop %v1282
        %v1297 = vmul.f32 %v1296, 0.6931472
        %v1298 = vlog2.pop %v1283
        %v1299 = vmul.f32 %v1298, 0.6931472
        %1308 = vset.pattern.permute.xlu0 0
        %1309 = vperm.xlu0 %1308, %v1285
        %v1310 = vpop.permute.xlu0 %1309
        %1311 = vset.pattern.permute.xlu0 0
        %1312 = vperm.xlu0 %1311, %v1287
        %v1313 = vpop.permute.xlu0 %1312
        %1314 = vset.pattern.permute.xlu0 0
        %1315 = vperm.xlu0 %1314, %v1289
        %v1316 = vpop.permute.xlu0 %1315
        %1317 = vset.pattern.permute.xlu0 0
        %1318 = vperm.xlu0 %1317, %v1291
        %v1319 = vpop.permute.xlu0 %1318
        %1320 = vset.pattern.permute.xlu0 0
        %1321 = vperm.xlu0 %1320, %v1293
        %v1322 = vpop.permute.xlu0 %1321
        %1323 = vset.pattern.permute.xlu0 0
        %1324 = vperm.xlu0 %1323, %v1295
        %v1325 = vpop.permute.xlu0 %1324
        %1326 = vset.pattern.permute.xlu0 0
        %1327 = vperm.xlu0 %1326, %v1297
        %v1328 = vpop.permute.xlu0 %1327
        %1329 = vset.pattern.permute.xlu0 0
        %1330 = vperm.xlu0 %1329, %v1299
        %v1331 = vpop.permute.xlu0 %1330
        %v1332 = vlaneseq
        %v1333 = vshrl.u32 %v1332, 7
        %v1334 = vsub.s32 %v829, %v1333
        %v1335 = vrot.slane %v1310, %v1334
        %v1336 = vlaneseq
        %v1337 = vshrl.u32 %v1336, 7
        %v1338 = vsub.s32 %v829, %v1337
        %v1339 = vrot.slane %v1313, %v1338
        %v1340 = vlaneseq
        %v1341 = vshrl.u32 %v1340, 7
        %v1342 = vsub.s32 %v829, %v1341
        %v1343 = vrot.slane %v1316, %v1342
        %v1344 = vlaneseq
        %v1345 = vshrl.u32 %v1344, 7
        %v1346 = vsub.s32 %v829, %v1345
        %v1347 = vrot.slane %v1319, %v1346
        %v1348 = vlaneseq
        %v1349 = vshrl.u32 %v1348, 7
        %v1350 = vsub.s32 %v829, %v1349
        %v1351 = vrot.slane %v1322, %v1350
        %v1352 = vlaneseq
        %v1353 = vshrl.u32 %v1352, 7
        %v1354 = vsub.s32 %v829, %v1353
        %v1355 = vrot.slane %v1325, %v1354
        %v1356 = vlaneseq
        %v1357 = vshrl.u32 %v1356, 7
        %v1358 = vsub.s32 %v829, %v1357
        %v1359 = vrot.slane %v1328, %v1358
        %v1360 = vlaneseq
        %v1361 = vshrl.u32 %v1360, 7
        %v1362 = vsub.s32 %v829, %v1361
        %v1363 = vrot.slane %v1331, %v1362
        %v1364 = vsel %vm834, %v1339, %v1335
        %v1365 = vsel %vm835, %v1343, %v1364
        %v1366 = vsel %vm837, %v1347, %v1365
        %v1367 = vsel %vm839, %v1351, %v1366
        %v1368 = vsel %vm841, %v1355, %v1367
        %v1369 = vsel %vm843, %v1359, %v1368
        %v1370 = vsel %vm845, %v1363, %v1369
        %v1372 = vsub.f32 %v875, %v1370
        %v1373 = vlog2.pop %v1230
        %v1374 = vmul.f32 %v1373, 0.6931472
        %1376 = vset.pattern.permute.xlu0 0
        %1377 = vperm.xlu0 %1376, %v1374
        %v1378 = vpop.permute.xlu0 %1377
        %v1380 = vadd.f32 %v1372, %v1378
        %v1381 = vsel %vm857, %v1380, 0.0
        %v1382 = vld [vmem:[%s292] sm:$0x1]
        %vm1383 = vcmask 64512
        %v1384 = vsel %vm1383, %v1381, 0.0
        %1385 = vadd.xlane.f32.xlu0 %v1384
        %v1386 = vpop.xlane.xlu0 %1385
        %v1387 = vrot.slane %v1386, 4
        %v1388 = vadd.f32 %v1386, %v1387
        %v1389 = vrot.slane %v1388, 2
        %v1390 = vadd.f32 %v1388, %v1389
        %v1391 = vrot.slane %v1390, 1
        %v1392 = vadd.f32 %v1390, %v1391
        %s1393 = vtos %v1392
        %v1394 = vstv %s1393
        %v1395 = vadd.f32 %v1382, %v1394
        %1396 = vst [vmem:[%s292] sm:$0x1] %v1395
        %s1397 = sand.u32 %s186, 1
        %s1398 = scalar_lea.sflag [#allocation7], %s1397
        %s1399 = sand.u32 %s186, 1
        %s1400 = scalar_lea.vmem [#allocation6], %s1399
        // Predicated region
        $region49: #{tpu_custom_call.1} parent=43 // pred_check
          %p1401 = pneg %p196
        $region50: #{tpu_custom_call.1} parent=43 // pred_check_branch
          %1403 = sbr.rel (%p1401) target = $region52
        $region51: #{tpu_custom_call.1} parent=43 // pred_region
          %s1405 = ssub.s32 16, 16
          %1406 = vsyncadd %s1398, %s1405
          %s1407 = smul.addr %s24, 16
          %s1408 = scalar_lea.hbm %s6, %s1407
          %s1410 = sshll.u32 %s1400, 4
          %s1411 = int_to_ptr.vmem [resolvable:$true] %s1410
          %1413 = dma.vmem_to_hbm [thread:$0]  %s1411, 16, %s1408, %s1398
        $region52: #{tpu_custom_call.1} parent=43 // pred_fallthru
          _
      $region44: #{tpu_custom_call.1} parent=5 // pred_fallthru
        _
      %p1414 = scmp.le.s32.totalorder 2, %s15
      // Predicated region
      $region53: #{tpu_custom_call.1} parent=5 // pred_check
        %p1415 = pneg %p1414
      $region54: #{tpu_custom_call.1} parent=5 // pred_check_branch
        %1417 = sbr.rel (%p1415) target = $region56
      $region55: #{tpu_custom_call.1} parent=5 // pred_region
        %s1418 = ssub.s32 %s15, 2
        // Predicated region
        $region57: #{tpu_custom_call.1} parent=55 // pred_check
          %p1419 = pneg %p202
        $region58: #{tpu_custom_call.1} parent=55 // pred_check_branch
          %1421 = sbr.rel (%p1419) target = $region60
        $region59: #{tpu_custom_call.1} parent=55 // pred_region
          %s1422 = sand.u32 %s187, 1
          %s1423 = scalar_lea.sflag [#allocation7], %s1422
          %s1424 = sand.u32 %s187, 1
          %s1425 = scalar_lea.vmem [#allocation6], %s1424
          %1426 = dma.done %s1423, 16
        $region60: #{tpu_custom_call.1} parent=55 // pred_fallthru
          _
      $region56: #{tpu_custom_call.1} parent=5 // pred_fallthru
        _
    $region6: #{tpu_custom_call.1} parent=1 // loop_footer
      %s19 = sadd.s32 1, %s15
    $region7: #{tpu_custom_call.1} parent=1 // loop_footer_branch
      %14 = sbr.rel target = $region3
    $region8: #{tpu_custom_call.1} parent=1 // loop_exit
      _
    %1427 = vsyncpa [#allocation7], 1
    %s1428 = scalar_lea.sflag [#allocation7], 1
    %1429 = vsyncpa %s1428, 1

</llo_original>
